<compile_context>
chip_gen: v7x
topology: tpu7x:2x2x1
jax: 0.10.0
libtpu: 0.0.40
codegen_flags: <defaults>
</compile_context>

<pallas_src>
import jax
import jax.numpy as jnp
from jax.experimental import pallas as pl
from jax.experimental.pallas import tpu as pltpu

IN_FEATURES = 1024
HIDDEN = 512
NUM_ACTIONS = 10
N_PAD = 128  # lane-padded fc2 output width (multiple of 128)


def mlp_kernel(x_ref, w1_ref, b1_ref, w2_ref, b2_ref, o_ref):
    # fc1: bf16 MXU matmul, f32 accumulate; bias + ReLU in f32.
    h = jnp.dot(x_ref[...], w1_ref[...], preferred_element_type=jnp.float32)
    h = jnp.maximum(h + b1_ref[...], 0.0)
    # fc2: re-quantize activation to bf16 for the MXU, accumulate in f32.
    y = jnp.dot(h.astype(jnp.bfloat16), w2_ref[...],
                preferred_element_type=jnp.float32)
    o_ref[...] = jnp.maximum(y + b2_ref[...], 0.0).astype(o_ref.dtype)


def fn_forward(x, w1, b1, w2, b2, *, tb=1024):
    """x: (B, 1024) f32; w1: (1024, 512); b1: (1, 512); w2: (512, 10); b2: (1, 10).

    Returns (B, 10) f32 == relu(relu(x @ w1 + b1) @ w2 + b2).
    """
    B = x.shape[0]

    # Batch tile: multiple of 8 (sublane), capped at tb; pad B up to a multiple.
    b_pad8 = max(8, -(-B // 8) * 8)
    TB = min(tb, b_pad8)
    B_pad = -(-B // TB) * TB
    if B_pad != B:
        x = jnp.pad(x, ((0, B_pad - B), (0, 0)))

    # bf16 weights / activations (halves HBM bytes, 2x MXU rate); f32 biases.
    x_bf = x.astype(jnp.bfloat16)
    w1_bf = w1.astype(jnp.bfloat16)
    b1_f = b1.astype(jnp.float32)
    # Lane-pad fc2 to 128 output columns (zero padded) -> unmasked stores.
    w2_bf = jnp.zeros((HIDDEN, N_PAD), jnp.bfloat16).at[:, :NUM_ACTIONS].set(
        w2.astype(jnp.bfloat16))
    b2_p = jnp.zeros((1, N_PAD), jnp.float32).at[:, :NUM_ACTIONS].set(
        b2.astype(jnp.float32))

    grid = (B_pad // TB,)
    out_padded = pl.pallas_call(
        mlp_kernel,
        out_shape=jax.ShapeDtypeStruct((B_pad, N_PAD), jnp.float32),
        grid=grid,
        in_specs=[
            pl.BlockSpec((TB, IN_FEATURES), lambda i: (i, 0)),      # x: streamed tiles
            pl.BlockSpec((IN_FEATURES, HIDDEN), lambda i: (0, 0)),  # W1: resident
            pl.BlockSpec((1, HIDDEN), lambda i: (0, 0)),            # b1: resident
            pl.BlockSpec((HIDDEN, N_PAD), lambda i: (0, 0)),        # W2: resident
            pl.BlockSpec((1, N_PAD), lambda i: (0, 0)),             # b2: resident
        ],
        out_specs=pl.BlockSpec((TB, N_PAD), lambda i: (i, 0)),
        compiler_params=pltpu.CompilerParams(
            dimension_semantics=("parallel",),
            vmem_limit_bytes=32 * 1024 * 1024,
        ),
    )(x_bf, w1_bf, b1_f, w2_bf, b2_p)
    return out_padded[:B, :NUM_ACTIONS]


def init_params(key):
    """Deterministic init mimicking nn.Linear default: U(-1/sqrt(fan_in), +)."""
    k1, k2, k3, k4 = jax.random.split(key, 4)
    bound1 = 1.0 / jnp.sqrt(jnp.float32(IN_FEATURES))
    bound2 = 1.0 / jnp.sqrt(jnp.float32(HIDDEN))
    # Stored as (in_features, out_features) — transpose of PyTorch's layout,
    # so the kernel computes x @ W + b directly.
    w1 = jax.random.uniform(k1, (IN_FEATURES, HIDDEN), jnp.float32, -bound1, bound1)
    b1 = jax.random.uniform(k2, (1, HIDDEN), jnp.float32, -bound1, bound1)
    w2 = jax.random.uniform(k3, (HIDDEN, NUM_ACTIONS), jnp.float32, -bound2, bound2)
    b2 = jax.random.uniform(k4, (1, NUM_ACTIONS), jnp.float32, -bound2, bound2)
    return w1, b1, w2, b2


if __name__ == "__main__":
    key = jax.random.PRNGKey(0)
    kx, kp = jax.random.split(key)
    w1, b1, w2, b2 = init_params(kp)

    def ref_f32(x):
        return jnp.maximum(jnp.maximum(x @ w1 + b1, 0.0) @ w2 + b2, 0.0)

    ok = True
    # Small batch (exercises TB == padded B, single grid step).
    B = 8
    x = jax.random.normal(kx, (B, IN_FEATURES), jnp.float32)
    out = jax.block_until_ready(fn_forward(x, w1, b1, w2, b2))
    ok &= out.shape == (B, NUM_ACTIONS)
    ok &= bool(jnp.allclose(out, ref_f32(x), atol=2e-2, rtol=2e-2))

    # Ragged batch (exercises padding + slice path).
    B2 = 20
    x2 = jax.random.normal(jax.random.fold_in(kx, 1), (B2, IN_FEATURES), jnp.float32)
    out2 = jax.block_until_ready(fn_forward(x2, w1, b1, w2, b2))
    ok &= out2.shape == (B2, NUM_ACTIONS)
    ok &= bool(jnp.allclose(out2, ref_f32(x2), atol=2e-2, rtol=2e-2))

    assert ok
    print("KERNEL_OK")
</pallas_src>

<mosaic_0001>
module attributes {stable_mosaic.version = 11 : i64} {
  func.func @mlp_kernel(%arg0: i32, %arg1: memref<8x1024xbf16, #tpu.memory_space<vmem>>, %arg2: memref<1024x512xbf16, #tpu.memory_space<vmem>>, %arg3: memref<1x512xf32, #tpu.memory_space<vmem>>, %arg4: memref<512x128xbf16, #tpu.memory_space<vmem>>, %arg5: memref<1x128xf32, #tpu.memory_space<vmem>>, %arg6: memref<8x128xf32, #tpu.memory_space<vmem>>) attributes {dimension_semantics = [#tpu.dimension_semantics<parallel>], iteration_bounds = array<i64: 1>, scalar_prefetch = 0 : i64, scratch_operands = 0 : i64, tpu.core_type = #tpu.core_type<tc>, window_params = [{transform_indices = @transform_0, window_bounds = array<i64: 8, 1024>}, {pipeline_mode = #tpu.pipeline_mode<synchronous>, transform_indices = @transform_1, window_bounds = array<i64: 1024, 512>}, {pipeline_mode = #tpu.pipeline_mode<synchronous>, transform_indices = @transform_2, window_bounds = array<i64: 1, 512>}, {pipeline_mode = #tpu.pipeline_mode<synchronous>, transform_indices = @transform_3, window_bounds = array<i64: 512, 128>}, {pipeline_mode = #tpu.pipeline_mode<synchronous>, transform_indices = @transform_4, window_bounds = array<i64: 1, 128>}, {transform_indices = @transform_5, window_bounds = array<i64: 8, 128>}]} {
    %c0 = arith.constant 0 : index
    %c0_0 = arith.constant 0 : index
    %0 = vector.load %arg1[%c0, %c0_0] : memref<8x1024xbf16, #tpu.memory_space<vmem>>, vector<8x1024xbf16>
    %c0_1 = arith.constant 0 : index
    %c0_2 = arith.constant 0 : index
    %1 = vector.load %arg2[%c0_1, %c0_2] : memref<1024x512xbf16, #tpu.memory_space<vmem>>, vector<1024x512xbf16>
    %cst = arith.constant dense<0.000000e+00> : vector<8x512xf32>
    %2 = tpu.matmul %0, %1, %cst {dimension_numbers = #tpu.dot_dimension_numbers<[1], [0], [0], [1], [0, 0, 1, 1], [], []>} : vector<8x1024xbf16>, vector<1024x512xbf16>, vector<8x512xf32> -> vector<8x512xf32>
    %c0_3 = arith.constant 0 : index
    %c0_4 = arith.constant 0 : index
    %3 = vector.load %arg3[%c0_3, %c0_4] : memref<1x512xf32, #tpu.memory_space<vmem>>, vector<1x512xf32>
    %4 = vector.broadcast %3 : vector<1x512xf32> to vector<8x512xf32>
    %5 = arith.addf %2, %4 : vector<8x512xf32>
    %cst_5 = arith.constant 0.000000e+00 : f32
    %6 = vector.broadcast %cst_5 : f32 to vector<8x512xf32>
    %7 = arith.maximumf %5, %6 : vector<8x512xf32>
    %8 = arith.truncf %7 : vector<8x512xf32> to vector<8x512xbf16>
    %c0_6 = arith.constant 0 : index
    %c0_7 = arith.constant 0 : index
    %9 = vector.load %arg4[%c0_6, %c0_7] : memref<512x128xbf16, #tpu.memory_space<vmem>>, vector<512x128xbf16>
    %cst_8 = arith.constant dense<0.000000e+00> : vector<8x128xf32>
    %10 = tpu.matmul %8, %9, %cst_8 {dimension_numbers = #tpu.dot_dimension_numbers<[1], [0], [0], [1], [0, 0, 1, 1], [], []>} : vector<8x512xbf16>, vector<512x128xbf16>, vector<8x128xf32> -> vector<8x128xf32>
    %c0_9 = arith.constant 0 : index
    %c0_10 = arith.constant 0 : index
    %11 = vector.load %arg5[%c0_9, %c0_10] : memref<1x128xf32, #tpu.memory_space<vmem>>, vector<1x128xf32>
    %12 = vector.broadcast %11 : vector<1x128xf32> to vector<8x128xf32>
    %13 = arith.addf %10, %12 : vector<8x128xf32>
    %cst_11 = arith.constant 0.000000e+00 : f32
    %14 = vector.broadcast %cst_11 : f32 to vector<8x128xf32>
    %15 = arith.maximumf %13, %14 : vector<8x128xf32>
    %c0_12 = arith.constant 0 : index
    %c0_13 = arith.constant 0 : index
    %16 = vector.load %arg6[%c0_12, %c0_13] : memref<8x128xf32, #tpu.memory_space<vmem>>, vector<8x128xf32>
    tpu.vector_store %arg6[%c0_12, %c0_13], %15 {strides = array<i32>} : memref<8x128xf32, #tpu.memory_space<vmem>>, vector<8x128xf32>,
    return
  }
  func.func @transform_0(%arg0: i32) -> (i32, i32) {
    %c0_i32 = arith.constant 0 : i32
    %c0_i32_0 = arith.constant 0 : i32
    return %arg0, %c0_i32 : i32, i32
  }
  func.func @transform_1(%arg0: i32) -> (i32, i32) {
    %c0_i32 = arith.constant 0 : i32
    %c0_i32_0 = arith.constant 0 : i32
    %c0_i32_1 = arith.constant 0 : i32
    return %c0_i32, %c0_i32_0 : i32, i32
  }
  func.func @transform_2(%arg0: i32) -> (i32, i32) {
    %c0_i32 = arith.constant 0 : i32
    %c0_i32_0 = arith.constant 0 : i32
    %c0_i32_1 = arith.constant 0 : i32
    return %c0_i32, %c0_i32_0 : i32, i32
  }
  func.func @transform_3(%arg0: i32) -> (i32, i32) {
    %c0_i32 = arith.constant 0 : i32
    %c0_i32_0 = arith.constant 0 : i32
    %c0_i32_1 = arith.constant 0 : i32
    return %c0_i32, %c0_i32_0 : i32, i32
  }
  func.func @transform_4(%arg0: i32) -> (i32, i32) {
    %c0_i32 = arith.constant 0 : i32
    %c0_i32_0 = arith.constant 0 : i32
    %c0_i32_1 = arith.constant 0 : i32
    return %c0_i32, %c0_i32_0 : i32, i32
  }
  func.func @transform_5(%arg0: i32) -> (i32, i32) {
    %c0_i32 = arith.constant 0 : i32
    %c0_i32_0 = arith.constant 0 : i32
    return %arg0, %c0_i32 : i32, i32
  }
}

</mosaic_0001>

<llo_original>
// kernel: tpu_custom_call.1
$region0: #{tpu_custom_call.1}
  #allocation0 [shape = 'u32[]', space=smem, size = 0x4, offset = 0x4, fixed_abs, tag = 'smem constant byte address 0x4 - core index']
  #allocation1 [shape = 'u32[144,128]{1,0:T(1,128)}', space=vmem, size = 0x12000, scoped, tag = 'internal scratch']
  %s0 = inlined_call_operand.hbm [shape: bf16[8,1024], index: 0, kind: input, shape index: {}]
  %s1 = inlined_call_operand.hbm [shape: bf16[1024,512], index: 1, kind: input, shape index: {}]
  %s2 = inlined_call_operand.vmem [shape: f32[1,512], index: 2, kind: input, shape index: {}]
  %s3 = inlined_call_operand.hbm [shape: bf16[512,128], index: 3, kind: input, shape index: {}]
  %s4 = inlined_call_operand.vmem [shape: f32[1,128], index: 4, kind: input, shape index: {}]
  %s5 = inlined_call_operand.hbm [shape: f32[8,128], index: 5, kind: output, shape index: {}]
  %s6 = sld [smem:[#allocation0]]
  $region42: #{tpu_custom_call.1} parent=0
    _
  %s8 = ssub.s32 1, %s6
  %s9 = scalar_select 0, %s8, %s6
  $region1: #{tpu_custom_call.1} parent=0
    #allocation2 [shape = 'u8[16384]{0}', space=vmem, size = 0x4000, scoped, tag = 'input window, operand 0, single buffered']
    #allocation3 [shape = 's32[1]{0}', space=sflag, size = 0x4, scoped, tag = 'scoped memory for tpu_custom_call.1']
    #allocation4 [shape = 's32[1]{0}', space=sflag, size = 0x4, scoped, tag = 'scoped memory for tpu_custom_call.1']
    #allocation5 [shape = 'u8[1048576]{0}', space=vmem, size = 0x100000, scoped, tag = 'input window, operand 1, single buffered']
    #allocation6 [shape = 's32[1]{0}', space=sflag, size = 0x4, scoped, tag = 'scoped memory for tpu_custom_call.1']
    #allocation7 [shape = 'u8[131072]{0}', space=vmem, size = 0x20000, scoped, tag = 'input window, operand 3, single buffered']
    #allocation8 [shape = 'u8[4096]{0}', space=vmem, size = 0x1000, scoped, tag = 'output window, operand 0, single buffered']
    %10 = vsyncpa [#allocation3], 0
    %11 = vsyncpa [#allocation6], 0
    %12 = vsyncpa [#allocation4], 0
    // Predicated region
    $region2: #{tpu_custom_call.1} parent=1 // pred_check
      _
    $region3: #{tpu_custom_call.1} parent=1 // pred_check_branch
      %14 = sbr.rel (0) target = $region5
    $region4: #{tpu_custom_call.1} parent=1 // pred_region
      %s16 = ssub.s32 512, 512
      %17 = vsyncadd [#allocation3], %s16
      %s19 = sshll.u32 [#allocation2], 4
      %s20 = int_to_ptr.vmem [resolvable:$true] %s19
      %22 = dma.hbm_to_vmem [thread:$0]  %s0, 512, %s20, [#allocation3]
    $region5: #{tpu_custom_call.1} parent=1 // pred_fallthru
      _
    // Predicated region
    $region6: #{tpu_custom_call.1} parent=1 // pred_check
      _
    $region7: #{tpu_custom_call.1} parent=1 // pred_check_branch
      %24 = sbr.rel (0) target = $region9
    $region8: #{tpu_custom_call.1} parent=1 // pred_region
      %s26 = ssub.s32 32768, 32768
      %27 = vsyncadd [#allocation6], %s26
      %s28 = sshll.u32 [#allocation5], 4
      %s29 = int_to_ptr.vmem [resolvable:$true] %s28
      %34 = dma.hbm_to_vmem [thread:$0]  %s1, 32768, %s29, [#allocation6], 256, 256, 16
    $region9: #{tpu_custom_call.1} parent=1 // pred_fallthru
      _
    // Predicated region
    $region10: #{tpu_custom_call.1} parent=1 // pred_check
      _
    $region11: #{tpu_custom_call.1} parent=1 // pred_check_branch
      %36 = sbr.rel (0) target = $region13
    $region12: #{tpu_custom_call.1} parent=1 // pred_region
      _
    $region13: #{tpu_custom_call.1} parent=1 // pred_fallthru
      _
    // Predicated region
    $region14: #{tpu_custom_call.1} parent=1 // pred_check
      _
    $region15: #{tpu_custom_call.1} parent=1 // pred_check_branch
      %38 = sbr.rel (0) target = $region17
    $region16: #{tpu_custom_call.1} parent=1 // pred_region
      %s40 = ssub.s32 4096, 4096
      %41 = vsyncadd [#allocation6], %s40
      %s42 = sshll.u32 [#allocation7], 4
      %s43 = int_to_ptr.vmem [resolvable:$true] %s42
      %48 = dma.hbm_to_vmem [thread:$0]  %s3, 4096, %s43, [#allocation6], 64, 64, 4
    $region17: #{tpu_custom_call.1} parent=1 // pred_fallthru
      _
    // Predicated region
    $region18: #{tpu_custom_call.1} parent=1 // pred_check
      _
    $region19: #{tpu_custom_call.1} parent=1 // pred_check_branch
      %50 = sbr.rel (0) target = $region21
    $region20: #{tpu_custom_call.1} parent=1 // pred_region
      _
    $region21: #{tpu_custom_call.1} parent=1 // pred_fallthru
      _
    // Predicated region
    $region22: #{tpu_custom_call.1} parent=1 // pred_check
      _
    $region23: #{tpu_custom_call.1} parent=1 // pred_check_branch
      %52 = sbr.rel (0) target = $region25
    $region24: #{tpu_custom_call.1} parent=1 // pred_region
      %53 = dma.done [#allocation3], 512
    $region25: #{tpu_custom_call.1} parent=1 // pred_fallthru
      _
    // Predicated region
    $region26: #{tpu_custom_call.1} parent=1 // pred_check
      _
    $region27: #{tpu_custom_call.1} parent=1 // pred_check_branch
      %55 = sbr.rel (0) target = $region29
    $region28: #{tpu_custom_call.1} parent=1 // pred_region
      %56 = dma.done [#allocation6], 32768
    $region29: #{tpu_custom_call.1} parent=1 // pred_fallthru
      _
    // Predicated region
    $region30: #{tpu_custom_call.1} parent=1 // pred_check
      _
    $region31: #{tpu_custom_call.1} parent=1 // pred_check_branch
      %58 = sbr.rel (0) target = $region33
    $region32: #{tpu_custom_call.1} parent=1 // pred_region
      %59 = dma.done [#allocation6], 4096
    $region33: #{tpu_custom_call.1} parent=1 // pred_fallthru
      _
    %v61 = vld [vmem:[#allocation2] sm:$0xff]
    %v62 = vld [vmem:[#allocation2 + $0x8] sm:$0xff]
    %v63 = vld [vmem:[#allocation2 + $0x10] sm:$0xff]
    %v64 = vld [vmem:[#allocation2 + $0x18] sm:$0xff]
    %v65 = vld [vmem:[#allocation5] sm:$0xff]
    %v66 = vld [vmem:[#allocation5 + $0x8] sm:$0xff]
    %v67 = vld [vmem:[#allocation5 + $0x10] sm:$0xff]
    %v68 = vld [vmem:[#allocation5 + $0x18] sm:$0xff]
    %v69 = vld [vmem:[#allocation5 + $0x20] sm:$0xff]
    %v70 = vld [vmem:[#allocation5 + $0x28] sm:$0xff]
    %v71 = vld [vmem:[#allocation5 + $0x30] sm:$0xff]
    %v72 = vld [vmem:[#allocation5 + $0x38] sm:$0xff]
    %v73 = vld [vmem:[#allocation5 + $0x40] sm:$0xff]
    %v74 = vld [vmem:[#allocation5 + $0x48] sm:$0xff]
    %v75 = vld [vmem:[#allocation5 + $0x50] sm:$0xff]
    %v76 = vld [vmem:[#allocation5 + $0x58] sm:$0xff]
    %v77 = vld [vmem:[#allocation5 + $0x60] sm:$0xff]
    %v78 = vld [vmem:[#allocation5 + $0x68] sm:$0xff]
    %v79 = vld [vmem:[#allocation5 + $0x70] sm:$0xff]
    %v80 = vld [vmem:[#allocation5 + $0x78] sm:$0xff]
    %v81 = vld [vmem:[#allocation5 + $0x80] sm:$0xff]
    %v82 = vld [vmem:[#allocation5 + $0x88] sm:$0xff]
    %v83 = vld [vmem:[#allocation5 + $0x90] sm:$0xff]
    %v84 = vld [vmem:[#allocation5 + $0x98] sm:$0xff]
    %v85 = vld [vmem:[#allocation5 + $0xa0] sm:$0xff]
    %v86 = vld [vmem:[#allocation5 + $0xa8] sm:$0xff]
    %v87 = vld [vmem:[#allocation5 + $0xb0] sm:$0xff]
    %v88 = vld [vmem:[#allocation5 + $0xb8] sm:$0xff]
    %v89 = vld [vmem:[#allocation5 + $0xc0] sm:$0xff]
    %v90 = vld [vmem:[#allocation5 + $0xc8] sm:$0xff]
    %v91 = vld [vmem:[#allocation5 + $0xd0] sm:$0xff]
    %v92 = vld [vmem:[#allocation5 + $0xd8] sm:$0xff]
    %v93 = vld [vmem:[#allocation5 + $0xe0] sm:$0xff]
    %v94 = vld [vmem:[#allocation5 + $0xe8] sm:$0xff]
    %v95 = vld [vmem:[#allocation5 + $0xf0] sm:$0xff]
    %v96 = vld [vmem:[#allocation5 + $0xf8] sm:$0xff]
    %v97 = vld [vmem:[#allocation5 + $0x100] sm:$0xff]
    %v98 = vld [vmem:[#allocation5 + $0x108] sm:$0xff]
    %v99 = vld [vmem:[#allocation5 + $0x110] sm:$0xff]
    %v100 = vld [vmem:[#allocation5 + $0x118] sm:$0xff]
    %v101 = vld [vmem:[#allocation5 + $0x120] sm:$0xff]
    %v102 = vld [vmem:[#allocation5 + $0x128] sm:$0xff]
    %v103 = vld [vmem:[#allocation5 + $0x130] sm:$0xff]
    %v104 = vld [vmem:[#allocation5 + $0x138] sm:$0xff]
    %v105 = vld [vmem:[#allocation5 + $0x140] sm:$0xff]
    %v106 = vld [vmem:[#allocation5 + $0x148] sm:$0xff]
    %v107 = vld [vmem:[#allocation5 + $0x150] sm:$0xff]
    %v108 = vld [vmem:[#allocation5 + $0x158] sm:$0xff]
    %v109 = vld [vmem:[#allocation5 + $0x160] sm:$0xff]
    %v110 = vld [vmem:[#allocation5 + $0x168] sm:$0xff]
    %v111 = vld [vmem:[#allocation5 + $0x170] sm:$0xff]
    %v112 = vld [vmem:[#allocation5 + $0x178] sm:$0xff]
    %v113 = vld [vmem:[#allocation5 + $0x180] sm:$0xff]
    %v114 = vld [vmem:[#allocation5 + $0x188] sm:$0xff]
    %v115 = vld [vmem:[#allocation5 + $0x190] sm:$0xff]
    %v116 = vld [vmem:[#allocation5 + $0x198] sm:$0xff]
    %v117 = vld [vmem:[#allocation5 + $0x1a0] sm:$0xff]
    %v118 = vld [vmem:[#allocation5 + $0x1a8] sm:$0xff]
    %v119 = vld [vmem:[#allocation5 + $0x1b0] sm:$0xff]
    %v120 = vld [vmem:[#allocation5 + $0x1b8] sm:$0xff]
    %v121 = vld [vmem:[#allocation5 + $0x1c0] sm:$0xff]
    %v122 = vld [vmem:[#allocation5 + $0x1c8] sm:$0xff]
    %v123 = vld [vmem:[#allocation5 + $0x1d0] sm:$0xff]
    %v124 = vld [vmem:[#allocation5 + $0x1d8] sm:$0xff]
    %v125 = vld [vmem:[#allocation5 + $0x1e0] sm:$0xff]
    %v126 = vld [vmem:[#allocation5 + $0x1e8] sm:$0xff]
    %v127 = vld [vmem:[#allocation5 + $0x1f0] sm:$0xff]
    %v128 = vld [vmem:[#allocation5 + $0x1f8] sm:$0xff]
    %v129 = vld [vmem:[#allocation5 + $0x200] sm:$0xff]
    %v130 = vld [vmem:[#allocation5 + $0x208] sm:$0xff]
    %v131 = vld [vmem:[#allocation5 + $0x210] sm:$0xff]
    %v132 = vld [vmem:[#allocation5 + $0x218] sm:$0xff]
    %v133 = vld [vmem:[#allocation5 + $0x220] sm:$0xff]
    %v134 = vld [vmem:[#allocation5 + $0x228] sm:$0xff]
    %v135 = vld [vmem:[#allocation5 + $0x230] sm:$0xff]
    %v136 = vld [vmem:[#allocation5 + $0x238] sm:$0xff]
    %v137 = vld [vmem:[#allocation5 + $0x240] sm:$0xff]
    %v138 = vld [vmem:[#allocation5 + $0x248] sm:$0xff]
    %v139 = vld [vmem:[#allocation5 + $0x250] sm:$0xff]
    %v140 = vld [vmem:[#allocation5 + $0x258] sm:$0xff]
    %v141 = vld [vmem:[#allocation5 + $0x260] sm:$0xff]
    %v142 = vld [vmem:[#allocation5 + $0x268] sm:$0xff]
    %v143 = vld [vmem:[#allocation5 + $0x270] sm:$0xff]
    %v144 = vld [vmem:[#allocation5 + $0x278] sm:$0xff]
    %v145 = vld [vmem:[#allocation5 + $0x280] sm:$0xff]
    %v146 = vld [vmem:[#allocation5 + $0x288] sm:$0xff]
    %v147 = vld [vmem:[#allocation5 + $0x290] sm:$0xff]
    %v148 = vld [vmem:[#allocation5 + $0x298] sm:$0xff]
    %v149 = vld [vmem:[#allocation5 + $0x2a0] sm:$0xff]
    %v150 = vld [vmem:[#allocation5 + $0x2a8] sm:$0xff]
    %v151 = vld [vmem:[#allocation5 + $0x2b0] sm:$0xff]
    %v152 = vld [vmem:[#allocation5 + $0x2b8] sm:$0xff]
    %v153 = vld [vmem:[#allocation5 + $0x2c0] sm:$0xff]
    %v154 = vld [vmem:[#allocation5 + $0x2c8] sm:$0xff]
    %v155 = vld [vmem:[#allocation5 + $0x2d0] sm:$0xff]
    %v156 = vld [vmem:[#allocation5 + $0x2d8] sm:$0xff]
    %v157 = vld [vmem:[#allocation5 + $0x2e0] sm:$0xff]
    %v158 = vld [vmem:[#allocation5 + $0x2e8] sm:$0xff]
    %v159 = vld [vmem:[#allocation5 + $0x2f0] sm:$0xff]
    %v160 = vld [vmem:[#allocation5 + $0x2f8] sm:$0xff]
    %v161 = vld [vmem:[#allocation5 + $0x300] sm:$0xff]
    %v162 = vld [vmem:[#allocation5 + $0x308] sm:$0xff]
    %v163 = vld [vmem:[#allocation5 + $0x310] sm:$0xff]
    %v164 = vld [vmem:[#allocation5 + $0x318] sm:$0xff]
    %v165 = vld [vmem:[#allocation5 + $0x320] sm:$0xff]
    %v166 = vld [vmem:[#allocation5 + $0x328] sm:$0xff]
    %v167 = vld [vmem:[#allocation5 + $0x330] sm:$0xff]
    %v168 = vld [vmem:[#allocation5 + $0x338] sm:$0xff]
    %v169 = vld [vmem:[#allocation5 + $0x340] sm:$0xff]
    %v170 = vld [vmem:[#allocation5 + $0x348] sm:$0xff]
    %v171 = vld [vmem:[#allocation5 + $0x350] sm:$0xff]
    %v172 = vld [vmem:[#allocation5 + $0x358] sm:$0xff]
    %v173 = vld [vmem:[#allocation5 + $0x360] sm:$0xff]
    %v174 = vld [vmem:[#allocation5 + $0x368] sm:$0xff]
    %v175 = vld [vmem:[#allocation5 + $0x370] sm:$0xff]
    %v176 = vld [vmem:[#allocation5 + $0x378] sm:$0xff]
    %v177 = vld [vmem:[#allocation5 + $0x380] sm:$0xff]
    %v178 = vld [vmem:[#allocation5 + $0x388] sm:$0xff]
    %v179 = vld [vmem:[#allocation5 + $0x390] sm:$0xff]
    %v180 = vld [vmem:[#allocation5 + $0x398] sm:$0xff]
    %v181 = vld [vmem:[#allocation5 + $0x3a0] sm:$0xff]
    %v182 = vld [vmem:[#allocation5 + $0x3a8] sm:$0xff]
    %v183 = vld [vmem:[#allocation5 + $0x3b0] sm:$0xff]
    %v184 = vld [vmem:[#allocation5 + $0x3b8] sm:$0xff]
    %v185 = vld [vmem:[#allocation5 + $0x3c0] sm:$0xff]
    %v186 = vld [vmem:[#allocation5 + $0x3c8] sm:$0xff]
    %v187 = vld [vmem:[#allocation5 + $0x3d0] sm:$0xff]
    %v188 = vld [vmem:[#allocation5 + $0x3d8] sm:$0xff]
    %v189 = vld [vmem:[#allocation5 + $0x3e0] sm:$0xff]
    %v190 = vld [vmem:[#allocation5 + $0x3e8] sm:$0xff]
    %v191 = vld [vmem:[#allocation5 + $0x3f0] sm:$0xff]
    %v192 = vld [vmem:[#allocation5 + $0x3f8] sm:$0xff]
    %v193 = vld [vmem:[#allocation5 + $0x400] sm:$0xff]
    %v194 = vld [vmem:[#allocation5 + $0x408] sm:$0xff]
    %v195 = vld [vmem:[#allocation5 + $0x410] sm:$0xff]
    %v196 = vld [vmem:[#allocation5 + $0x418] sm:$0xff]
    %v197 = vld [vmem:[#allocation5 + $0x420] sm:$0xff]
    %v198 = vld [vmem:[#allocation5 + $0x428] sm:$0xff]
    %v199 = vld [vmem:[#allocation5 + $0x430] sm:$0xff]
    %v200 = vld [vmem:[#allocation5 + $0x438] sm:$0xff]
    %v201 = vld [vmem:[#allocation5 + $0x440] sm:$0xff]
    %v202 = vld [vmem:[#allocation5 + $0x448] sm:$0xff]
    %v203 = vld [vmem:[#allocation5 + $0x450] sm:$0xff]
    %v204 = vld [vmem:[#allocation5 + $0x458] sm:$0xff]
    %v205 = vld [vmem:[#allocation5 + $0x460] sm:$0xff]
    %v206 = vld [vmem:[#allocation5 + $0x468] sm:$0xff]
    %v207 = vld [vmem:[#allocation5 + $0x470] sm:$0xff]
    %v208 = vld [vmem:[#allocation5 + $0x478] sm:$0xff]
    %v209 = vld [vmem:[#allocation5 + $0x480] sm:$0xff]
    %v210 = vld [vmem:[#allocation5 + $0x488] sm:$0xff]
    %v211 = vld [vmem:[#allocation5 + $0x490] sm:$0xff]
    %v212 = vld [vmem:[#allocation5 + $0x498] sm:$0xff]
    %v213 = vld [vmem:[#allocation5 + $0x4a0] sm:$0xff]
    %v214 = vld [vmem:[#allocation5 + $0x4a8] sm:$0xff]
    %v215 = vld [vmem:[#allocation5 + $0x4b0] sm:$0xff]
    %v216 = vld [vmem:[#allocation5 + $0x4b8] sm:$0xff]
    %v217 = vld [vmem:[#allocation5 + $0x4c0] sm:$0xff]
    %v218 = vld [vmem:[#allocation5 + $0x4c8] sm:$0xff]
    %v219 = vld [vmem:[#allocation5 + $0x4d0] sm:$0xff]
    %v220 = vld [vmem:[#allocation5 + $0x4d8] sm:$0xff]
    %v221 = vld [vmem:[#allocation5 + $0x4e0] sm:$0xff]
    %v222 = vld [vmem:[#allocation5 + $0x4e8] sm:$0xff]
    %v223 = vld [vmem:[#allocation5 + $0x4f0] sm:$0xff]
    %v224 = vld [vmem:[#allocation5 + $0x4f8] sm:$0xff]
    %v225 = vld [vmem:[#allocation5 + $0x500] sm:$0xff]
    %v226 = vld [vmem:[#allocation5 + $0x508] sm:$0xff]
    %v227 = vld [vmem:[#allocation5 + $0x510] sm:$0xff]
    %v228 = vld [vmem:[#allocation5 + $0x518] sm:$0xff]
    %v229 = vld [vmem:[#allocation5 + $0x520] sm:$0xff]
    %v230 = vld [vmem:[#allocation5 + $0x528] sm:$0xff]
    %v231 = vld [vmem:[#allocation5 + $0x530] sm:$0xff]
    %v232 = vld [vmem:[#allocation5 + $0x538] sm:$0xff]
    %v233 = vld [vmem:[#allocation5 + $0x540] sm:$0xff]
    %v234 = vld [vmem:[#allocation5 + $0x548] sm:$0xff]
    %v235 = vld [vmem:[#allocation5 + $0x550] sm:$0xff]
    %v236 = vld [vmem:[#allocation5 + $0x558] sm:$0xff]
    %v237 = vld [vmem:[#allocation5 + $0x560] sm:$0xff]
    %v238 = vld [vmem:[#allocation5 + $0x568] sm:$0xff]
    %v239 = vld [vmem:[#allocation5 + $0x570] sm:$0xff]
    %v240 = vld [vmem:[#allocation5 + $0x578] sm:$0xff]
    %v241 = vld [vmem:[#allocation5 + $0x580] sm:$0xff]
    %v242 = vld [vmem:[#allocation5 + $0x588] sm:$0xff]
    %v243 = vld [vmem:[#allocation5 + $0x590] sm:$0xff]
    %v244 = vld [vmem:[#allocation5 + $0x598] sm:$0xff]
    %v245 = vld [vmem:[#allocation5 + $0x5a0] sm:$0xff]
    %v246 = vld [vmem:[#allocation5 + $0x5a8] sm:$0xff]
    %v247 = vld [vmem:[#allocation5 + $0x5b0] sm:$0xff]
    %v248 = vld [vmem:[#allocation5 + $0x5b8] sm:$0xff]
    %v249 = vld [vmem:[#allocation5 + $0x5c0] sm:$0xff]
    %v250 = vld [vmem:[#allocation5 + $0x5c8] sm:$0xff]
    %v251 = vld [vmem:[#allocation5 + $0x5d0] sm:$0xff]
    %v252 = vld [vmem:[#allocation5 + $0x5d8] sm:$0xff]
    %v253 = vld [vmem:[#allocation5 + $0x5e0] sm:$0xff]
    %v254 = vld [vmem:[#allocation5 + $0x5e8] sm:$0xff]
    %v255 = vld [vmem:[#allocation5 + $0x5f0] sm:$0xff]
    %v256 = vld [vmem:[#allocation5 + $0x5f8] sm:$0xff]
    %v257 = vld [vmem:[#allocation5 + $0x600] sm:$0xff]
    %v258 = vld [vmem:[#allocation5 + $0x608] sm:$0xff]
    %v259 = vld [vmem:[#allocation5 + $0x610] sm:$0xff]
    %v260 = vld [vmem:[#allocation5 + $0x618] sm:$0xff]
    %v261 = vld [vmem:[#allocation5 + $0x620] sm:$0xff]
    %v262 = vld [vmem:[#allocation5 + $0x628] sm:$0xff]
    %v263 = vld [vmem:[#allocation5 + $0x630] sm:$0xff]
    %v264 = vld [vmem:[#allocation5 + $0x638] sm:$0xff]
    %v265 = vld [vmem:[#allocation5 + $0x640] sm:$0xff]
    %v266 = vld [vmem:[#allocation5 + $0x648] sm:$0xff]
    %v267 = vld [vmem:[#allocation5 + $0x650] sm:$0xff]
    %v268 = vld [vmem:[#allocation5 + $0x658] sm:$0xff]
    %v269 = vld [vmem:[#allocation5 + $0x660] sm:$0xff]
    %v270 = vld [vmem:[#allocation5 + $0x668] sm:$0xff]
    %v271 = vld [vmem:[#allocation5 + $0x670] sm:$0xff]
    %v272 = vld [vmem:[#allocation5 + $0x678] sm:$0xff]
    %v273 = vld [vmem:[#allocation5 + $0x680] sm:$0xff]
    %v274 = vld [vmem:[#allocation5 + $0x688] sm:$0xff]
    %v275 = vld [vmem:[#allocation5 + $0x690] sm:$0xff]
    %v276 = vld [vmem:[#allocation5 + $0x698] sm:$0xff]
    %v277 = vld [vmem:[#allocation5 + $0x6a0] sm:$0xff]
    %v278 = vld [vmem:[#allocation5 + $0x6a8] sm:$0xff]
    %v279 = vld [vmem:[#allocation5 + $0x6b0] sm:$0xff]
    %v280 = vld [vmem:[#allocation5 + $0x6b8] sm:$0xff]
    %v281 = vld [vmem:[#allocation5 + $0x6c0] sm:$0xff]
    %v282 = vld [vmem:[#allocation5 + $0x6c8] sm:$0xff]
    %v283 = vld [vmem:[#allocation5 + $0x6d0] sm:$0xff]
    %v284 = vld [vmem:[#allocation5 + $0x6d8] sm:$0xff]
    %v285 = vld [vmem:[#allocation5 + $0x6e0] sm:$0xff]
    %v286 = vld [vmem:[#allocation5 + $0x6e8] sm:$0xff]
    %v287 = vld [vmem:[#allocation5 + $0x6f0] sm:$0xff]
    %v288 = vld [vmem:[#allocation5 + $0x6f8] sm:$0xff]
    %v289 = vld [vmem:[#allocation5 + $0x700] sm:$0xff]
    %v290 = vld [vmem:[#allocation5 + $0x708] sm:$0xff]
    %v291 = vld [vmem:[#allocation5 + $0x710] sm:$0xff]
    %v292 = vld [vmem:[#allocation5 + $0x718] sm:$0xff]
    %v293 = vld [vmem:[#allocation5 + $0x720] sm:$0xff]
    %v294 = vld [vmem:[#allocation5 + $0x728] sm:$0xff]
    %v295 = vld [vmem:[#allocation5 + $0x730] sm:$0xff]
    %v296 = vld [vmem:[#allocation5 + $0x738] sm:$0xff]
    %v297 = vld [vmem:[#allocation5 + $0x740] sm:$0xff]
    %v298 = vld [vmem:[#allocation5 + $0x748] sm:$0xff]
    %v299 = vld [vmem:[#allocation5 + $0x750] sm:$0xff]
    %v300 = vld [vmem:[#allocation5 + $0x758] sm:$0xff]
    %v301 = vld [vmem:[#allocation5 + $0x760] sm:$0xff]
    %v302 = vld [vmem:[#allocation5 + $0x768] sm:$0xff]
    %v303 = vld [vmem:[#allocation5 + $0x770] sm:$0xff]
    %v304 = vld [vmem:[#allocation5 + $0x778] sm:$0xff]
    %v305 = vld [vmem:[#allocation5 + $0x780] sm:$0xff]
    %v306 = vld [vmem:[#allocation5 + $0x788] sm:$0xff]
    %v307 = vld [vmem:[#allocation5 + $0x790] sm:$0xff]
    %v308 = vld [vmem:[#allocation5 + $0x798] sm:$0xff]
    %v309 = vld [vmem:[#allocation5 + $0x7a0] sm:$0xff]
    %v310 = vld [vmem:[#allocation5 + $0x7a8] sm:$0xff]
    %v311 = vld [vmem:[#allocation5 + $0x7b0] sm:$0xff]
    %v312 = vld [vmem:[#allocation5 + $0x7b8] sm:$0xff]
    %v313 = vld [vmem:[#allocation5 + $0x7c0] sm:$0xff]
    %v314 = vld [vmem:[#allocation5 + $0x7c8] sm:$0xff]
    %v315 = vld [vmem:[#allocation5 + $0x7d0] sm:$0xff]
    %v316 = vld [vmem:[#allocation5 + $0x7d8] sm:$0xff]
    %v317 = vld [vmem:[#allocation5 + $0x7e0] sm:$0xff]
    %v318 = vld [vmem:[#allocation5 + $0x7e8] sm:$0xff]
    %v319 = vld [vmem:[#allocation5 + $0x7f0] sm:$0xff]
    %v320 = vld [vmem:[#allocation5 + $0x7f8] sm:$0xff]
    %v321 = vld [vmem:[%s2] sm:$0xf]
    %v323 = vlaneseq
    %v324 = vshrl.u32 %v323, 7
    %v325 = vsub.s32 0, %v324
    %v326 = vrot.slane %v321, %v325
    %v327 = vlaneseq
    %v328 = vshrl.u32 %v327, 7
    %v329 = vsub.s32 1, %v328
    %v330 = vrot.slane %v321, %v329
    %v331 = vlaneseq
    %v332 = vshrl.u32 %v331, 7
    %v333 = vsub.s32 2, %v332
    %v334 = vrot.slane %v321, %v333
    %v335 = vlaneseq
    %v336 = vshrl.u32 %v335, 7
    %v337 = vsub.s32 3, %v336
    %v338 = vrot.slane %v321, %v337
    %v347 = vunpack.c.l.b16 %v61
    %v348 = vunpack.c.h.b16 %v61
    %v349 = vunpack.c.l.b16 %v62
    %v350 = vunpack.c.h.b16 %v62
    %v351 = vunpack.c.l.b16 %v63
    %v352 = vunpack.c.h.b16 %v63
    %v353 = vunpack.c.l.b16 %v64
    %v354 = vunpack.c.h.b16 %v64
    %v355 = vpack.c.b16 %v347, %v347
    %v356 = vpack.c.b16 %v348, %v348
    %v357 = vpack.c.b16 %v349, %v349
    %v358 = vpack.c.b16 %v350, %v350
    %v359 = vpack.c.b16 %v351, %v351
    %v360 = vpack.c.b16 %v352, %v352
    %v361 = vpack.c.b16 %v353, %v353
    %v362 = vpack.c.b16 %v354, %v354
    %v627 = vunpack.c.l.b16 %v65
    %v628 = vunpack.c.h.b16 %v65
    %v629 = vunpack.c.l.b16 %v66
    %v630 = vunpack.c.h.b16 %v66
    %v631 = vunpack.c.l.b16 %v67
    %v632 = vunpack.c.h.b16 %v67
    %v633 = vunpack.c.l.b16 %v68
    %v634 = vunpack.c.h.b16 %v68
    %v635 = vunpack.c.l.b16 %v69
    %v636 = vunpack.c.h.b16 %v69
    %v637 = vunpack.c.l.b16 %v70
    %v638 = vunpack.c.h.b16 %v70
    %v639 = vunpack.c.l.b16 %v71
    %v640 = vunpack.c.h.b16 %v71
    %v641 = vunpack.c.l.b16 %v72
    %v642 = vunpack.c.h.b16 %v72
    %v643 = vunpack.c.l.b16 %v73
    %v644 = vunpack.c.h.b16 %v73
    %v645 = vunpack.c.l.b16 %v74
    %v646 = vunpack.c.h.b16 %v74
    %v647 = vunpack.c.l.b16 %v75
    %v648 = vunpack.c.h.b16 %v75
    %v649 = vunpack.c.l.b16 %v76
    %v650 = vunpack.c.h.b16 %v76
    %v651 = vunpack.c.l.b16 %v77
    %v652 = vunpack.c.h.b16 %v77
    %v653 = vunpack.c.l.b16 %v78
    %v654 = vunpack.c.h.b16 %v78
    %v655 = vunpack.c.l.b16 %v79
    %v656 = vunpack.c.h.b16 %v79
    %v657 = vunpack.c.l.b16 %v80
    %v658 = vunpack.c.h.b16 %v80
    %v659 = vunpack.c.l.b16 %v81
    %v660 = vunpack.c.h.b16 %v81
    %v661 = vunpack.c.l.b16 %v82
    %v662 = vunpack.c.h.b16 %v82
    %v663 = vunpack.c.l.b16 %v83
    %v664 = vunpack.c.h.b16 %v83
    %v665 = vunpack.c.l.b16 %v84
    %v666 = vunpack.c.h.b16 %v84
    %v667 = vunpack.c.l.b16 %v85
    %v668 = vunpack.c.h.b16 %v85
    %v669 = vunpack.c.l.b16 %v86
    %v670 = vunpack.c.h.b16 %v86
    %v671 = vunpack.c.l.b16 %v87
    %v672 = vunpack.c.h.b16 %v87
    %v673 = vunpack.c.l.b16 %v88
    %v674 = vunpack.c.h.b16 %v88
    %v675 = vunpack.c.l.b16 %v89
    %v676 = vunpack.c.h.b16 %v89
    %v677 = vunpack.c.l.b16 %v90
    %v678 = vunpack.c.h.b16 %v90
    %v679 = vunpack.c.l.b16 %v91
    %v680 = vunpack.c.h.b16 %v91
    %v681 = vunpack.c.l.b16 %v92
    %v682 = vunpack.c.h.b16 %v92
    %v683 = vunpack.c.l.b16 %v93
    %v684 = vunpack.c.h.b16 %v93
    %v685 = vunpack.c.l.b16 %v94
    %v686 = vunpack.c.h.b16 %v94
    %v687 = vunpack.c.l.b16 %v95
    %v688 = vunpack.c.h.b16 %v95
    %v689 = vunpack.c.l.b16 %v96
    %v690 = vunpack.c.h.b16 %v96
    %v691 = vunpack.c.l.b16 %v97
    %v692 = vunpack.c.h.b16 %v97
    %v693 = vunpack.c.l.b16 %v98
    %v694 = vunpack.c.h.b16 %v98
    %v695 = vunpack.c.l.b16 %v99
    %v696 = vunpack.c.h.b16 %v99
    %v697 = vunpack.c.l.b16 %v100
    %v698 = vunpack.c.h.b16 %v100
    %v699 = vunpack.c.l.b16 %v101
    %v700 = vunpack.c.h.b16 %v101
    %v701 = vunpack.c.l.b16 %v102
    %v702 = vunpack.c.h.b16 %v102
    %v703 = vunpack.c.l.b16 %v103
    %v704 = vunpack.c.h.b16 %v103
    %v705 = vunpack.c.l.b16 %v104
    %v706 = vunpack.c.h.b16 %v104
    %v707 = vunpack.c.l.b16 %v105
    %v708 = vunpack.c.h.b16 %v105
    %v709 = vunpack.c.l.b16 %v106
    %v710 = vunpack.c.h.b16 %v106
    %v711 = vunpack.c.l.b16 %v107
    %v712 = vunpack.c.h.b16 %v107
    %v713 = vunpack.c.l.b16 %v108
    %v714 = vunpack.c.h.b16 %v108
    %v715 = vunpack.c.l.b16 %v109
    %v716 = vunpack.c.h.b16 %v109
    %v717 = vunpack.c.l.b16 %v110
    %v718 = vunpack.c.h.b16 %v110
    %v719 = vunpack.c.l.b16 %v111
    %v720 = vunpack.c.h.b16 %v111
    %v721 = vunpack.c.l.b16 %v112
    %v722 = vunpack.c.h.b16 %v112
    %v723 = vunpack.c.l.b16 %v113
    %v724 = vunpack.c.h.b16 %v113
    %v725 = vunpack.c.l.b16 %v114
    %v726 = vunpack.c.h.b16 %v114
    %v727 = vunpack.c.l.b16 %v115
    %v728 = vunpack.c.h.b16 %v115
    %v729 = vunpack.c.l.b16 %v116
    %v730 = vunpack.c.h.b16 %v116
    %v731 = vunpack.c.l.b16 %v117
    %v732 = vunpack.c.h.b16 %v117
    %v733 = vunpack.c.l.b16 %v118
    %v734 = vunpack.c.h.b16 %v118
    %v735 = vunpack.c.l.b16 %v119
    %v736 = vunpack.c.h.b16 %v119
    %v737 = vunpack.c.l.b16 %v120
    %v738 = vunpack.c.h.b16 %v120
    %v739 = vunpack.c.l.b16 %v121
    %v740 = vunpack.c.h.b16 %v121
    %v741 = vunpack.c.l.b16 %v122
    %v742 = vunpack.c.h.b16 %v122
    %v743 = vunpack.c.l.b16 %v123
    %v744 = vunpack.c.h.b16 %v123
    %v745 = vunpack.c.l.b16 %v124
    %v746 = vunpack.c.h.b16 %v124
    %v747 = vunpack.c.l.b16 %v125
    %v748 = vunpack.c.h.b16 %v125
    %v749 = vunpack.c.l.b16 %v126
    %v750 = vunpack.c.h.b16 %v126
    %v751 = vunpack.c.l.b16 %v127
    %v752 = vunpack.c.h.b16 %v127
    %v753 = vunpack.c.l.b16 %v128
    %v754 = vunpack.c.h.b16 %v128
    %v755 = vunpack.c.l.b16 %v129
    %v756 = vunpack.c.h.b16 %v129
    %v757 = vunpack.c.l.b16 %v130
    %v758 = vunpack.c.h.b16 %v130
    %v759 = vunpack.c.l.b16 %v131
    %v760 = vunpack.c.h.b16 %v131
    %v761 = vunpack.c.l.b16 %v132
    %v762 = vunpack.c.h.b16 %v132
    %v763 = vunpack.c.l.b16 %v133
    %v764 = vunpack.c.h.b16 %v133
    %v765 = vunpack.c.l.b16 %v134
    %v766 = vunpack.c.h.b16 %v134
    %v767 = vunpack.c.l.b16 %v135
    %v768 = vunpack.c.h.b16 %v135
    %v769 = vunpack.c.l.b16 %v136
    %v770 = vunpack.c.h.b16 %v136
    %v771 = vunpack.c.l.b16 %v137
    %v772 = vunpack.c.h.b16 %v137
    %v773 = vunpack.c.l.b16 %v138
    %v774 = vunpack.c.h.b16 %v138
    %v775 = vunpack.c.l.b16 %v139
    %v776 = vunpack.c.h.b16 %v139
    %v777 = vunpack.c.l.b16 %v140
    %v778 = vunpack.c.h.b16 %v140
    %v779 = vunpack.c.l.b16 %v141
    %v780 = vunpack.c.h.b16 %v141
    %v781 = vunpack.c.l.b16 %v142
    %v782 = vunpack.c.h.b16 %v142
    %v783 = vunpack.c.l.b16 %v143
    %v784 = vunpack.c.h.b16 %v143
    %v785 = vunpack.c.l.b16 %v144
    %v786 = vunpack.c.h.b16 %v144
    %v787 = vunpack.c.l.b16 %v145
    %v788 = vunpack.c.h.b16 %v145
    %v789 = vunpack.c.l.b16 %v146
    %v790 = vunpack.c.h.b16 %v146
    %v791 = vunpack.c.l.b16 %v147
    %v792 = vunpack.c.h.b16 %v147
    %v793 = vunpack.c.l.b16 %v148
    %v794 = vunpack.c.h.b16 %v148
    %v795 = vunpack.c.l.b16 %v149
    %v796 = vunpack.c.h.b16 %v149
    %v797 = vunpack.c.l.b16 %v150
    %v798 = vunpack.c.h.b16 %v150
    %v799 = vunpack.c.l.b16 %v151
    %v800 = vunpack.c.h.b16 %v151
    %v801 = vunpack.c.l.b16 %v152
    %v802 = vunpack.c.h.b16 %v152
    %v803 = vunpack.c.l.b16 %v153
    %v804 = vunpack.c.h.b16 %v153
    %v805 = vunpack.c.l.b16 %v154
    %v806 = vunpack.c.h.b16 %v154
    %v807 = vunpack.c.l.b16 %v155
    %v808 = vunpack.c.h.b16 %v155
    %v809 = vunpack.c.l.b16 %v156
    %v810 = vunpack.c.h.b16 %v156
    %v811 = vunpack.c.l.b16 %v157
    %v812 = vunpack.c.h.b16 %v157
    %v813 = vunpack.c.l.b16 %v158
    %v814 = vunpack.c.h.b16 %v158
    %v815 = vunpack.c.l.b16 %v159
    %v816 = vunpack.c.h.b16 %v159
    %v817 = vunpack.c.l.b16 %v160
    %v818 = vunpack.c.h.b16 %v160
    %v819 = vunpack.c.l.b16 %v161
    %v820 = vunpack.c.h.b16 %v161
    %v821 = vunpack.c.l.b16 %v162
    %v822 = vunpack.c.h.b16 %v162
    %v823 = vunpack.c.l.b16 %v163
    %v824 = vunpack.c.h.b16 %v163
    %v825 = vunpack.c.l.b16 %v164
    %v826 = vunpack.c.h.b16 %v164
    %v827 = vunpack.c.l.b16 %v165
    %v828 = vunpack.c.h.b16 %v165
    %v829 = vunpack.c.l.b16 %v166
    %v830 = vunpack.c.h.b16 %v166
    %v831 = vunpack.c.l.b16 %v167
    %v832 = vunpack.c.h.b16 %v167
    %v833 = vunpack.c.l.b16 %v168
    %v834 = vunpack.c.h.b16 %v168
    %v835 = vunpack.c.l.b16 %v169
    %v836 = vunpack.c.h.b16 %v169
    %v837 = vunpack.c.l.b16 %v170
    %v838 = vunpack.c.h.b16 %v170
    %v839 = vunpack.c.l.b16 %v171
    %v840 = vunpack.c.h.b16 %v171
    %v841 = vunpack.c.l.b16 %v172
    %v842 = vunpack.c.h.b16 %v172
    %v843 = vunpack.c.l.b16 %v173
    %v844 = vunpack.c.h.b16 %v173
    %v845 = vunpack.c.l.b16 %v174
    %v846 = vunpack.c.h.b16 %v174
    %v847 = vunpack.c.l.b16 %v175
    %v848 = vunpack.c.h.b16 %v175
    %v849 = vunpack.c.l.b16 %v176
    %v850 = vunpack.c.h.b16 %v176
    %v851 = vunpack.c.l.b16 %v177
    %v852 = vunpack.c.h.b16 %v177
    %v853 = vunpack.c.l.b16 %v178
    %v854 = vunpack.c.h.b16 %v178
    %v855 = vunpack.c.l.b16 %v179
    %v856 = vunpack.c.h.b16 %v179
    %v857 = vunpack.c.l.b16 %v180
    %v858 = vunpack.c.h.b16 %v180
    %v859 = vunpack.c.l.b16 %v181
    %v860 = vunpack.c.h.b16 %v181
    %v861 = vunpack.c.l.b16 %v182
    %v862 = vunpack.c.h.b16 %v182
    %v863 = vunpack.c.l.b16 %v183
    %v864 = vunpack.c.h.b16 %v183
    %v865 = vunpack.c.l.b16 %v184
    %v866 = vunpack.c.h.b16 %v184
    %v867 = vunpack.c.l.b16 %v185
    %v868 = vunpack.c.h.b16 %v185
    %v869 = vunpack.c.l.b16 %v186
    %v870 = vunpack.c.h.b16 %v186
    %v871 = vunpack.c.l.b16 %v187
    %v872 = vunpack.c.h.b16 %v187
    %v873 = vunpack.c.l.b16 %v188
    %v874 = vunpack.c.h.b16 %v188
    %v875 = vunpack.c.l.b16 %v189
    %v876 = vunpack.c.h.b16 %v189
    %v877 = vunpack.c.l.b16 %v190
    %v878 = vunpack.c.h.b16 %v190
    %v879 = vunpack.c.l.b16 %v191
    %v880 = vunpack.c.h.b16 %v191
    %v881 = vunpack.c.l.b16 %v192
    %v882 = vunpack.c.h.b16 %v192
    %v883 = vunpack.c.l.b16 %v193
    %v884 = vunpack.c.h.b16 %v193
    %v885 = vunpack.c.l.b16 %v194
    %v886 = vunpack.c.h.b16 %v194
    %v887 = vunpack.c.l.b16 %v195
    %v888 = vunpack.c.h.b16 %v195
    %v889 = vunpack.c.l.b16 %v196
    %v890 = vunpack.c.h.b16 %v196
    %v891 = vunpack.c.l.b16 %v197
    %v892 = vunpack.c.h.b16 %v197
    %v893 = vunpack.c.l.b16 %v198
    %v894 = vunpack.c.h.b16 %v198
    %v895 = vunpack.c.l.b16 %v199
    %v896 = vunpack.c.h.b16 %v199
    %v897 = vunpack.c.l.b16 %v200
    %v898 = vunpack.c.h.b16 %v200
    %v899 = vunpack.c.l.b16 %v201
    %v900 = vunpack.c.h.b16 %v201
    %v901 = vunpack.c.l.b16 %v202
    %v902 = vunpack.c.h.b16 %v202
    %v903 = vunpack.c.l.b16 %v203
    %v904 = vunpack.c.h.b16 %v203
    %v905 = vunpack.c.l.b16 %v204
    %v906 = vunpack.c.h.b16 %v204
    %v907 = vunpack.c.l.b16 %v205
    %v908 = vunpack.c.h.b16 %v205
    %v909 = vunpack.c.l.b16 %v206
    %v910 = vunpack.c.h.b16 %v206
    %v911 = vunpack.c.l.b16 %v207
    %v912 = vunpack.c.h.b16 %v207
    %v913 = vunpack.c.l.b16 %v208
    %v914 = vunpack.c.h.b16 %v208
    %v915 = vunpack.c.l.b16 %v209
    %v916 = vunpack.c.h.b16 %v209
    %v917 = vunpack.c.l.b16 %v210
    %v918 = vunpack.c.h.b16 %v210
    %v919 = vunpack.c.l.b16 %v211
    %v920 = vunpack.c.h.b16 %v211
    %v921 = vunpack.c.l.b16 %v212
    %v922 = vunpack.c.h.b16 %v212
    %v923 = vunpack.c.l.b16 %v213
    %v924 = vunpack.c.h.b16 %v213
    %v925 = vunpack.c.l.b16 %v214
    %v926 = vunpack.c.h.b16 %v214
    %v927 = vunpack.c.l.b16 %v215
    %v928 = vunpack.c.h.b16 %v215
    %v929 = vunpack.c.l.b16 %v216
    %v930 = vunpack.c.h.b16 %v216
    %v931 = vunpack.c.l.b16 %v217
    %v932 = vunpack.c.h.b16 %v217
    %v933 = vunpack.c.l.b16 %v218
    %v934 = vunpack.c.h.b16 %v218
    %v935 = vunpack.c.l.b16 %v219
    %v936 = vunpack.c.h.b16 %v219
    %v937 = vunpack.c.l.b16 %v220
    %v938 = vunpack.c.h.b16 %v220
    %v939 = vunpack.c.l.b16 %v221
    %v940 = vunpack.c.h.b16 %v221
    %v941 = vunpack.c.l.b16 %v222
    %v942 = vunpack.c.h.b16 %v222
    %v943 = vunpack.c.l.b16 %v223
    %v944 = vunpack.c.h.b16 %v223
    %v945 = vunpack.c.l.b16 %v224
    %v946 = vunpack.c.h.b16 %v224
    %v947 = vunpack.c.l.b16 %v225
    %v948 = vunpack.c.h.b16 %v225
    %v949 = vunpack.c.l.b16 %v226
    %v950 = vunpack.c.h.b16 %v226
    %v951 = vunpack.c.l.b16 %v227
    %v952 = vunpack.c.h.b16 %v227
    %v953 = vunpack.c.l.b16 %v228
    %v954 = vunpack.c.h.b16 %v228
    %v955 = vunpack.c.l.b16 %v229
    %v956 = vunpack.c.h.b16 %v229
    %v957 = vunpack.c.l.b16 %v230
    %v958 = vunpack.c.h.b16 %v230
    %v959 = vunpack.c.l.b16 %v231
    %v960 = vunpack.c.h.b16 %v231
    %v961 = vunpack.c.l.b16 %v232
    %v962 = vunpack.c.h.b16 %v232
    %v963 = vunpack.c.l.b16 %v233
    %v964 = vunpack.c.h.b16 %v233
    %v965 = vunpack.c.l.b16 %v234
    %v966 = vunpack.c.h.b16 %v234
    %v967 = vunpack.c.l.b16 %v235
    %v968 = vunpack.c.h.b16 %v235
    %v969 = vunpack.c.l.b16 %v236
    %v970 = vunpack.c.h.b16 %v236
    %v971 = vunpack.c.l.b16 %v237
    %v972 = vunpack.c.h.b16 %v237
    %v973 = vunpack.c.l.b16 %v238
    %v974 = vunpack.c.h.b16 %v238
    %v975 = vunpack.c.l.b16 %v239
    %v976 = vunpack.c.h.b16 %v239
    %v977 = vunpack.c.l.b16 %v240
    %v978 = vunpack.c.h.b16 %v240
    %v979 = vunpack.c.l.b16 %v241
    %v980 = vunpack.c.h.b16 %v241
    %v981 = vunpack.c.l.b16 %v242
    %v982 = vunpack.c.h.b16 %v242
    %v983 = vunpack.c.l.b16 %v243
    %v984 = vunpack.c.h.b16 %v243
    %v985 = vunpack.c.l.b16 %v244
    %v986 = vunpack.c.h.b16 %v244
    %v987 = vunpack.c.l.b16 %v245
    %v988 = vunpack.c.h.b16 %v245
    %v989 = vunpack.c.l.b16 %v246
    %v990 = vunpack.c.h.b16 %v246
    %v991 = vunpack.c.l.b16 %v247
    %v992 = vunpack.c.h.b16 %v247
    %v993 = vunpack.c.l.b16 %v248
    %v994 = vunpack.c.h.b16 %v248
    %v995 = vunpack.c.l.b16 %v249
    %v996 = vunpack.c.h.b16 %v249
    %v997 = vunpack.c.l.b16 %v250
    %v998 = vunpack.c.h.b16 %v250
    %v999 = vunpack.c.l.b16 %v251
    %v1000 = vunpack.c.h.b16 %v251
    %v1001 = vunpack.c.l.b16 %v252
    %v1002 = vunpack.c.h.b16 %v252
    %v1003 = vunpack.c.l.b16 %v253
    %v1004 = vunpack.c.h.b16 %v253
    %v1005 = vunpack.c.l.b16 %v254
    %v1006 = vunpack.c.h.b16 %v254
    %v1007 = vunpack.c.l.b16 %v255
    %v1008 = vunpack.c.h.b16 %v255
    %v1009 = vunpack.c.l.b16 %v256
    %v1010 = vunpack.c.h.b16 %v256
    %v1011 = vunpack.c.l.b16 %v257
    %v1012 = vunpack.c.h.b16 %v257
    %v1013 = vunpack.c.l.b16 %v258
    %v1014 = vunpack.c.h.b16 %v258
    %v1015 = vunpack.c.l.b16 %v259
    %v1016 = vunpack.c.h.b16 %v259
    %v1017 = vunpack.c.l.b16 %v260
    %v1018 = vunpack.c.h.b16 %v260
    %v1019 = vunpack.c.l.b16 %v261
    %v1020 = vunpack.c.h.b16 %v261
    %v1021 = vunpack.c.l.b16 %v262
    %v1022 = vunpack.c.h.b16 %v262
    %v1023 = vunpack.c.l.b16 %v263
    %v1024 = vunpack.c.h.b16 %v263
    %v1025 = vunpack.c.l.b16 %v264
    %v1026 = vunpack.c.h.b16 %v264
    %v1027 = vunpack.c.l.b16 %v265
    %v1028 = vunpack.c.h.b16 %v265
    %v1029 = vunpack.c.l.b16 %v266
    %v1030 = vunpack.c.h.b16 %v266
    %v1031 = vunpack.c.l.b16 %v267
    %v1032 = vunpack.c.h.b16 %v267
    %v1033 = vunpack.c.l.b16 %v268
    %v1034 = vunpack.c.h.b16 %v268
    %v1035 = vunpack.c.l.b16 %v269
    %v1036 = vunpack.c.h.b16 %v269
    %v1037 = vunpack.c.l.b16 %v270
    %v1038 = vunpack.c.h.b16 %v270
    %v1039 = vunpack.c.l.b16 %v271
    %v1040 = vunpack.c.h.b16 %v271
    %v1041 = vunpack.c.l.b16 %v272
    %v1042 = vunpack.c.h.b16 %v272
    %v1043 = vunpack.c.l.b16 %v273
    %v1044 = vunpack.c.h.b16 %v273
    %v1045 = vunpack.c.l.b16 %v274
    %v1046 = vunpack.c.h.b16 %v274
    %v1047 = vunpack.c.l.b16 %v275
    %v1048 = vunpack.c.h.b16 %v275
    %v1049 = vunpack.c.l.b16 %v276
    %v1050 = vunpack.c.h.b16 %v276
    %v1051 = vunpack.c.l.b16 %v277
    %v1052 = vunpack.c.h.b16 %v277
    %v1053 = vunpack.c.l.b16 %v278
    %v1054 = vunpack.c.h.b16 %v278
    %v1055 = vunpack.c.l.b16 %v279
    %v1056 = vunpack.c.h.b16 %v279
    %v1057 = vunpack.c.l.b16 %v280
    %v1058 = vunpack.c.h.b16 %v280
    %v1059 = vunpack.c.l.b16 %v281
    %v1060 = vunpack.c.h.b16 %v281
    %v1061 = vunpack.c.l.b16 %v282
    %v1062 = vunpack.c.h.b16 %v282
    %v1063 = vunpack.c.l.b16 %v283
    %v1064 = vunpack.c.h.b16 %v283
    %v1065 = vunpack.c.l.b16 %v284
    %v1066 = vunpack.c.h.b16 %v284
    %v1067 = vunpack.c.l.b16 %v285
    %v1068 = vunpack.c.h.b16 %v285
    %v1069 = vunpack.c.l.b16 %v286
    %v1070 = vunpack.c.h.b16 %v286
    %v1071 = vunpack.c.l.b16 %v287
    %v1072 = vunpack.c.h.b16 %v287
    %v1073 = vunpack.c.l.b16 %v288
    %v1074 = vunpack.c.h.b16 %v288
    %v1075 = vunpack.c.l.b16 %v289
    %v1076 = vunpack.c.h.b16 %v289
    %v1077 = vunpack.c.l.b16 %v290
    %v1078 = vunpack.c.h.b16 %v290
    %v1079 = vunpack.c.l.b16 %v291
    %v1080 = vunpack.c.h.b16 %v291
    %v1081 = vunpack.c.l.b16 %v292
    %v1082 = vunpack.c.h.b16 %v292
    %v1083 = vunpack.c.l.b16 %v293
    %v1084 = vunpack.c.h.b16 %v293
    %v1085 = vunpack.c.l.b16 %v294
    %v1086 = vunpack.c.h.b16 %v294
    %v1087 = vunpack.c.l.b16 %v295
    %v1088 = vunpack.c.h.b16 %v295
    %v1089 = vunpack.c.l.b16 %v296
    %v1090 = vunpack.c.h.b16 %v296
    %v1091 = vunpack.c.l.b16 %v297
    %v1092 = vunpack.c.h.b16 %v297
    %v1093 = vunpack.c.l.b16 %v298
    %v1094 = vunpack.c.h.b16 %v298
    %v1095 = vunpack.c.l.b16 %v299
    %v1096 = vunpack.c.h.b16 %v299
    %v1097 = vunpack.c.l.b16 %v300
    %v1098 = vunpack.c.h.b16 %v300
    %v1099 = vunpack.c.l.b16 %v301
    %v1100 = vunpack.c.h.b16 %v301
    %v1101 = vunpack.c.l.b16 %v302
    %v1102 = vunpack.c.h.b16 %v302
    %v1103 = vunpack.c.l.b16 %v303
    %v1104 = vunpack.c.h.b16 %v303
    %v1105 = vunpack.c.l.b16 %v304
    %v1106 = vunpack.c.h.b16 %v304
    %v1107 = vunpack.c.l.b16 %v305
    %v1108 = vunpack.c.h.b16 %v305
    %v1109 = vunpack.c.l.b16 %v306
    %v1110 = vunpack.c.h.b16 %v306
    %v1111 = vunpack.c.l.b16 %v307
    %v1112 = vunpack.c.h.b16 %v307
    %v1113 = vunpack.c.l.b16 %v308
    %v1114 = vunpack.c.h.b16 %v308
    %v1115 = vunpack.c.l.b16 %v309
    %v1116 = vunpack.c.h.b16 %v309
    %v1117 = vunpack.c.l.b16 %v310
    %v1118 = vunpack.c.h.b16 %v310
    %v1119 = vunpack.c.l.b16 %v311
    %v1120 = vunpack.c.h.b16 %v311
    %v1121 = vunpack.c.l.b16 %v312
    %v1122 = vunpack.c.h.b16 %v312
    %v1123 = vunpack.c.l.b16 %v313
    %v1124 = vunpack.c.h.b16 %v313
    %v1125 = vunpack.c.l.b16 %v314
    %v1126 = vunpack.c.h.b16 %v314
    %v1127 = vunpack.c.l.b16 %v315
    %v1128 = vunpack.c.h.b16 %v315
    %v1129 = vunpack.c.l.b16 %v316
    %v1130 = vunpack.c.h.b16 %v316
    %v1131 = vunpack.c.l.b16 %v317
    %v1132 = vunpack.c.h.b16 %v317
    %v1133 = vunpack.c.l.b16 %v318
    %v1134 = vunpack.c.h.b16 %v318
    %v1135 = vunpack.c.l.b16 %v319
    %v1136 = vunpack.c.h.b16 %v319
    %v1137 = vunpack.c.l.b16 %v320
    %v1138 = vunpack.c.h.b16 %v320
    %v1139 = vpack.c.b16 %v631, %v627
    %v1140 = vpack.c.b16 %v632, %v628
    %v1141 = vpack.c.b16 %v633, %v629
    %v1142 = vpack.c.b16 %v634, %v630
    %v1143 = vpack.c.b16 %v639, %v635
    %v1144 = vpack.c.b16 %v640, %v636
    %v1145 = vpack.c.b16 %v641, %v637
    %v1146 = vpack.c.b16 %v642, %v638
    %v1147 = vpack.c.b16 %v647, %v643
    %v1148 = vpack.c.b16 %v648, %v644
    %v1149 = vpack.c.b16 %v649, %v645
    %v1150 = vpack.c.b16 %v650, %v646
    %v1151 = vpack.c.b16 %v655, %v651
    %v1152 = vpack.c.b16 %v656, %v652
    %v1153 = vpack.c.b16 %v657, %v653
    %v1154 = vpack.c.b16 %v658, %v654
    %v1155 = vpack.c.b16 %v663, %v659
    %v1156 = vpack.c.b16 %v664, %v660
    %v1157 = vpack.c.b16 %v665, %v661
    %v1158 = vpack.c.b16 %v666, %v662
    %v1159 = vpack.c.b16 %v671, %v667
    %v1160 = vpack.c.b16 %v672, %v668
    %v1161 = vpack.c.b16 %v673, %v669
    %v1162 = vpack.c.b16 %v674, %v670
    %v1163 = vpack.c.b16 %v679, %v675
    %v1164 = vpack.c.b16 %v680, %v676
    %v1165 = vpack.c.b16 %v681, %v677
    %v1166 = vpack.c.b16 %v682, %v678
    %v1167 = vpack.c.b16 %v687, %v683
    %v1168 = vpack.c.b16 %v688, %v684
    %v1169 = vpack.c.b16 %v689, %v685
    %v1170 = vpack.c.b16 %v690, %v686
    %v1171 = vpack.c.b16 %v695, %v691
    %v1172 = vpack.c.b16 %v696, %v692
    %v1173 = vpack.c.b16 %v697, %v693
    %v1174 = vpack.c.b16 %v698, %v694
    %v1175 = vpack.c.b16 %v703, %v699
    %v1176 = vpack.c.b16 %v704, %v700
    %v1177 = vpack.c.b16 %v705, %v701
    %v1178 = vpack.c.b16 %v706, %v702
    %v1179 = vpack.c.b16 %v711, %v707
    %v1180 = vpack.c.b16 %v712, %v708
    %v1181 = vpack.c.b16 %v713, %v709
    %v1182 = vpack.c.b16 %v714, %v710
    %v1183 = vpack.c.b16 %v719, %v715
    %v1184 = vpack.c.b16 %v720, %v716
    %v1185 = vpack.c.b16 %v721, %v717
    %v1186 = vpack.c.b16 %v722, %v718
    %v1187 = vpack.c.b16 %v727, %v723
    %v1188 = vpack.c.b16 %v728, %v724
    %v1189 = vpack.c.b16 %v729, %v725
    %v1190 = vpack.c.b16 %v730, %v726
    %v1191 = vpack.c.b16 %v735, %v731
    %v1192 = vpack.c.b16 %v736, %v732
    %v1193 = vpack.c.b16 %v737, %v733
    %v1194 = vpack.c.b16 %v738, %v734
    %v1195 = vpack.c.b16 %v743, %v739
    %v1196 = vpack.c.b16 %v744, %v740
    %v1197 = vpack.c.b16 %v745, %v741
    %v1198 = vpack.c.b16 %v746, %v742
    %v1199 = vpack.c.b16 %v751, %v747
    %v1200 = vpack.c.b16 %v752, %v748
    %v1201 = vpack.c.b16 %v753, %v749
    %v1202 = vpack.c.b16 %v754, %v750
    %v1203 = vpack.c.b16 %v759, %v755
    %v1204 = vpack.c.b16 %v760, %v756
    %v1205 = vpack.c.b16 %v761, %v757
    %v1206 = vpack.c.b16 %v762, %v758
    %v1207 = vpack.c.b16 %v767, %v763
    %v1208 = vpack.c.b16 %v768, %v764
    %v1209 = vpack.c.b16 %v769, %v765
    %v1210 = vpack.c.b16 %v770, %v766
    %v1211 = vpack.c.b16 %v775, %v771
    %v1212 = vpack.c.b16 %v776, %v772
    %v1213 = vpack.c.b16 %v777, %v773
    %v1214 = vpack.c.b16 %v778, %v774
    %v1215 = vpack.c.b16 %v783, %v779
    %v1216 = vpack.c.b16 %v784, %v780
    %v1217 = vpack.c.b16 %v785, %v781
    %v1218 = vpack.c.b16 %v786, %v782
    %v1219 = vpack.c.b16 %v791, %v787
    %v1220 = vpack.c.b16 %v792, %v788
    %v1221 = vpack.c.b16 %v793, %v789
    %v1222 = vpack.c.b16 %v794, %v790
    %v1223 = vpack.c.b16 %v799, %v795
    %v1224 = vpack.c.b16 %v800, %v796
    %v1225 = vpack.c.b16 %v801, %v797
    %v1226 = vpack.c.b16 %v802, %v798
    %v1227 = vpack.c.b16 %v807, %v803
    %v1228 = vpack.c.b16 %v808, %v804
    %v1229 = vpack.c.b16 %v809, %v805
    %v1230 = vpack.c.b16 %v810, %v806
    %v1231 = vpack.c.b16 %v815, %v811
    %v1232 = vpack.c.b16 %v816, %v812
    %v1233 = vpack.c.b16 %v817, %v813
    %v1234 = vpack.c.b16 %v818, %v814
    %v1235 = vpack.c.b16 %v823, %v819
    %v1236 = vpack.c.b16 %v824, %v820
    %v1237 = vpack.c.b16 %v825, %v821
    %v1238 = vpack.c.b16 %v826, %v822
    %v1239 = vpack.c.b16 %v831, %v827
    %v1240 = vpack.c.b16 %v832, %v828
    %v1241 = vpack.c.b16 %v833, %v829
    %v1242 = vpack.c.b16 %v834, %v830
    %v1243 = vpack.c.b16 %v839, %v835
    %v1244 = vpack.c.b16 %v840, %v836
    %v1245 = vpack.c.b16 %v841, %v837
    %v1246 = vpack.c.b16 %v842, %v838
    %v1247 = vpack.c.b16 %v847, %v843
    %v1248 = vpack.c.b16 %v848, %v844
    %v1249 = vpack.c.b16 %v849, %v845
    %v1250 = vpack.c.b16 %v850, %v846
    %v1251 = vpack.c.b16 %v855, %v851
    %v1252 = vpack.c.b16 %v856, %v852
    %v1253 = vpack.c.b16 %v857, %v853
    %v1254 = vpack.c.b16 %v858, %v854
    %v1255 = vpack.c.b16 %v863, %v859
    %v1256 = vpack.c.b16 %v864, %v860
    %v1257 = vpack.c.b16 %v865, %v861
    %v1258 = vpack.c.b16 %v866, %v862
    %v1259 = vpack.c.b16 %v871, %v867
    %v1260 = vpack.c.b16 %v872, %v868
    %v1261 = vpack.c.b16 %v873, %v869
    %v1262 = vpack.c.b16 %v874, %v870
    %v1263 = vpack.c.b16 %v879, %v875
    %v1264 = vpack.c.b16 %v880, %v876
    %v1265 = vpack.c.b16 %v881, %v877
    %v1266 = vpack.c.b16 %v882, %v878
    %v1267 = vpack.c.b16 %v887, %v883
    %v1268 = vpack.c.b16 %v888, %v884
    %v1269 = vpack.c.b16 %v889, %v885
    %v1270 = vpack.c.b16 %v890, %v886
    %v1271 = vpack.c.b16 %v895, %v891
    %v1272 = vpack.c.b16 %v896, %v892
    %v1273 = vpack.c.b16 %v897, %v893
    %v1274 = vpack.c.b16 %v898, %v894
    %v1275 = vpack.c.b16 %v903, %v899
    %v1276 = vpack.c.b16 %v904, %v900
    %v1277 = vpack.c.b16 %v905, %v901
    %v1278 = vpack.c.b16 %v906, %v902
    %v1279 = vpack.c.b16 %v911, %v907
    %v1280 = vpack.c.b16 %v912, %v908
    %v1281 = vpack.c.b16 %v913, %v909
    %v1282 = vpack.c.b16 %v914, %v910
    %v1283 = vpack.c.b16 %v919, %v915
    %v1284 = vpack.c.b16 %v920, %v916
    %v1285 = vpack.c.b16 %v921, %v917
    %v1286 = vpack.c.b16 %v922, %v918
    %v1287 = vpack.c.b16 %v927, %v923
    %v1288 = vpack.c.b16 %v928, %v924
    %v1289 = vpack.c.b16 %v929, %v925
    %v1290 = vpack.c.b16 %v930, %v926
    %v1291 = vpack.c.b16 %v935, %v931
    %v1292 = vpack.c.b16 %v936, %v932
    %v1293 = vpack.c.b16 %v937, %v933
    %v1294 = vpack.c.b16 %v938, %v934
    %v1295 = vpack.c.b16 %v943, %v939
    %v1296 = vpack.c.b16 %v944, %v940
    %v1297 = vpack.c.b16 %v945, %v941
    %v1298 = vpack.c.b16 %v946, %v942
    %v1299 = vpack.c.b16 %v951, %v947
    %v1300 = vpack.c.b16 %v952, %v948
    %v1301 = vpack.c.b16 %v953, %v949
    %v1302 = vpack.c.b16 %v954, %v950
    %v1303 = vpack.c.b16 %v959, %v955
    %v1304 = vpack.c.b16 %v960, %v956
    %v1305 = vpack.c.b16 %v961, %v957
    %v1306 = vpack.c.b16 %v962, %v958
    %v1307 = vpack.c.b16 %v967, %v963
    %v1308 = vpack.c.b16 %v968, %v964
    %v1309 = vpack.c.b16 %v969, %v965
    %v1310 = vpack.c.b16 %v970, %v966
    %v1311 = vpack.c.b16 %v975, %v971
    %v1312 = vpack.c.b16 %v976, %v972
    %v1313 = vpack.c.b16 %v977, %v973
    %v1314 = vpack.c.b16 %v978, %v974
    %v1315 = vpack.c.b16 %v983, %v979
    %v1316 = vpack.c.b16 %v984, %v980
    %v1317 = vpack.c.b16 %v985, %v981
    %v1318 = vpack.c.b16 %v986, %v982
    %v1319 = vpack.c.b16 %v991, %v987
    %v1320 = vpack.c.b16 %v992, %v988
    %v1321 = vpack.c.b16 %v993, %v989
    %v1322 = vpack.c.b16 %v994, %v990
    %v1323 = vpack.c.b16 %v999, %v995
    %v1324 = vpack.c.b16 %v1000, %v996
    %v1325 = vpack.c.b16 %v1001, %v997
    %v1326 = vpack.c.b16 %v1002, %v998
    %v1327 = vpack.c.b16 %v1007, %v1003
    %v1328 = vpack.c.b16 %v1008, %v1004
    %v1329 = vpack.c.b16 %v1009, %v1005
    %v1330 = vpack.c.b16 %v1010, %v1006
    %v1331 = vpack.c.b16 %v1015, %v1011
    %v1332 = vpack.c.b16 %v1016, %v1012
    %v1333 = vpack.c.b16 %v1017, %v1013
    %v1334 = vpack.c.b16 %v1018, %v1014
    %v1335 = vpack.c.b16 %v1023, %v1019
    %v1336 = vpack.c.b16 %v1024, %v1020
    %v1337 = vpack.c.b16 %v1025, %v1021
    %v1338 = vpack.c.b16 %v1026, %v1022
    %v1339 = vpack.c.b16 %v1031, %v1027
    %v1340 = vpack.c.b16 %v1032, %v1028
    %v1341 = vpack.c.b16 %v1033, %v1029
    %v1342 = vpack.c.b16 %v1034, %v1030
    %v1343 = vpack.c.b16 %v1039, %v1035
    %v1344 = vpack.c.b16 %v1040, %v1036
    %v1345 = vpack.c.b16 %v1041, %v1037
    %v1346 = vpack.c.b16 %v1042, %v1038
    %v1347 = vpack.c.b16 %v1047, %v1043
    %v1348 = vpack.c.b16 %v1048, %v1044
    %v1349 = vpack.c.b16 %v1049, %v1045
    %v1350 = vpack.c.b16 %v1050, %v1046
    %v1351 = vpack.c.b16 %v1055, %v1051
    %v1352 = vpack.c.b16 %v1056, %v1052
    %v1353 = vpack.c.b16 %v1057, %v1053
    %v1354 = vpack.c.b16 %v1058, %v1054
    %v1355 = vpack.c.b16 %v1063, %v1059
    %v1356 = vpack.c.b16 %v1064, %v1060
    %v1357 = vpack.c.b16 %v1065, %v1061
    %v1358 = vpack.c.b16 %v1066, %v1062
    %v1359 = vpack.c.b16 %v1071, %v1067
    %v1360 = vpack.c.b16 %v1072, %v1068
    %v1361 = vpack.c.b16 %v1073, %v1069
    %v1362 = vpack.c.b16 %v1074, %v1070
    %v1363 = vpack.c.b16 %v1079, %v1075
    %v1364 = vpack.c.b16 %v1080, %v1076
    %v1365 = vpack.c.b16 %v1081, %v1077
    %v1366 = vpack.c.b16 %v1082, %v1078
    %v1367 = vpack.c.b16 %v1087, %v1083
    %v1368 = vpack.c.b16 %v1088, %v1084
    %v1369 = vpack.c.b16 %v1089, %v1085
    %v1370 = vpack.c.b16 %v1090, %v1086
    %v1371 = vpack.c.b16 %v1095, %v1091
    %v1372 = vpack.c.b16 %v1096, %v1092
    %v1373 = vpack.c.b16 %v1097, %v1093
    %v1374 = vpack.c.b16 %v1098, %v1094
    %v1375 = vpack.c.b16 %v1103, %v1099
    %v1376 = vpack.c.b16 %v1104, %v1100
    %v1377 = vpack.c.b16 %v1105, %v1101
    %v1378 = vpack.c.b16 %v1106, %v1102
    %v1379 = vpack.c.b16 %v1111, %v1107
    %v1380 = vpack.c.b16 %v1112, %v1108
    %v1381 = vpack.c.b16 %v1113, %v1109
    %v1382 = vpack.c.b16 %v1114, %v1110
    %v1383 = vpack.c.b16 %v1119, %v1115
    %v1384 = vpack.c.b16 %v1120, %v1116
    %v1385 = vpack.c.b16 %v1121, %v1117
    %v1386 = vpack.c.b16 %v1122, %v1118
    %v1387 = vpack.c.b16 %v1127, %v1123
    %v1388 = vpack.c.b16 %v1128, %v1124
    %v1389 = vpack.c.b16 %v1129, %v1125
    %v1390 = vpack.c.b16 %v1130, %v1126
    %v1391 = vpack.c.b16 %v1135, %v1131
    %v1392 = vpack.c.b16 %v1136, %v1132
    %v1393 = vpack.c.b16 %v1137, %v1133
    %v1394 = vpack.c.b16 %v1138, %v1134
    %1651 = vmatprep.subr.bf16.mxu0 %v1140
    %1652 = vmatpush1.bf16.msra.mxu0 %v1139
    %1653 = vmatprep.subr.bf16.mxu0 %v1144
    %1654 = vmatpush1.bf16.msra.mxu0 %v1143
    %1655 = vmatprep.subr.bf16.mxu0 %v1148
    %1656 = vmatpush1.bf16.msra.mxu0 %v1147
    %1657 = vmatprep.subr.bf16.mxu0 %v1152
    %1658 = vmatpush1.bf16.msra.mxu0 %v1151
    %1659 = vmatprep.subr.bf16.mxu0 %v1156
    %1660 = vmatpush1.bf16.msra.mxu0 %v1155
    %1661 = vmatprep.subr.bf16.mxu0 %v1160
    %1662 = vmatpush1.bf16.msra.mxu0 %v1159
    %1663 = vmatprep.subr.bf16.mxu0 %v1164
    %1664 = vmatpush1.bf16.msra.mxu0 %v1163
    %1665 = vmatprep.subr.bf16.mxu0 %v1168
    %1666 = vmatpush1.bf16.msra.mxu0 %v1167
    %1667 = vmatprep.subr.bf16.mxu0 %v1172
    %1668 = vmatpush1.bf16.msra.mxu0 %v1171
    %1669 = vmatprep.subr.bf16.mxu0 %v1176
    %1670 = vmatpush1.bf16.msra.mxu0 %v1175
    %1671 = vmatprep.subr.bf16.mxu0 %v1180
    %1672 = vmatpush1.bf16.msra.mxu0 %v1179
    %1673 = vmatprep.subr.bf16.mxu0 %v1184
    %1674 = vmatpush1.bf16.msra.mxu0 %v1183
    %1675 = vmatprep.subr.bf16.mxu0 %v1188
    %1676 = vmatpush1.bf16.msra.mxu0 %v1187
    %1677 = vmatprep.subr.bf16.mxu0 %v1192
    %1678 = vmatpush1.bf16.msra.mxu0 %v1191
    %1679 = vmatprep.subr.bf16.mxu0 %v1196
    %1680 = vmatpush1.bf16.msra.mxu0 %v1195
    %1681 = vmatprep.subr.bf16.mxu0 %v1200
    %1682 = vmatpush1.bf16.msra.mxu0 %v1199
    %1683 = vmatprep.mubr.bf16.mxu0 %v356
    %1684 = vmatmul.mubr.bf16.gmra.mrb[0].mxu0 %v355
    %v1685 = vpop.f32.mrb[0].mxu0
    %v1686 = vadd.f32 %v326, %v1685
    %v1687 = vpop.f32.mrb[0].mxu0
    %v1688 = vadd.f32 %v330, %v1687
    %v1689 = vpop.f32.mrb[0].mxu0
    %v1690 = vpop.f32.mrb[0].mxu0
    %1691 = vdwg.mxu0
    %1692 = vmatprep.subr.bf16.mxu0 %v1204
    %1693 = vmatpush1.bf16.msra.mxu0 %v1203
    %1694 = vmatprep.subr.bf16.mxu0 %v1208
    %1695 = vmatpush1.bf16.msra.mxu0 %v1207
    %1696 = vmatprep.subr.bf16.mxu0 %v1212
    %1697 = vmatpush1.bf16.msra.mxu0 %v1211
    %1698 = vmatprep.subr.bf16.mxu0 %v1216
    %1699 = vmatpush1.bf16.msra.mxu0 %v1215
    %1700 = vmatprep.subr.bf16.mxu0 %v1220
    %1701 = vmatpush1.bf16.msra.mxu0 %v1219
    %1702 = vmatprep.subr.bf16.mxu0 %v1224
    %1703 = vmatpush1.bf16.msra.mxu0 %v1223
    %1704 = vmatprep.subr.bf16.mxu0 %v1228
    %1705 = vmatpush1.bf16.msra.mxu0 %v1227
    %1706 = vmatprep.subr.bf16.mxu0 %v1232
    %1707 = vmatpush1.bf16.msra.mxu0 %v1231
    %1708 = vmatprep.subr.bf16.mxu0 %v1236
    %1709 = vmatpush1.bf16.msra.mxu0 %v1235
    %1710 = vmatprep.subr.bf16.mxu0 %v1240
    %1711 = vmatpush1.bf16.msra.mxu0 %v1239
    %1712 = vmatprep.subr.bf16.mxu0 %v1244
    %1713 = vmatpush1.bf16.msra.mxu0 %v1243
    %1714 = vmatprep.subr.bf16.mxu0 %v1248
    %1715 = vmatpush1.bf16.msra.mxu0 %v1247
    %1716 = vmatprep.subr.bf16.mxu0 %v1252
    %1717 = vmatpush1.bf16.msra.mxu0 %v1251
    %1718 = vmatprep.subr.bf16.mxu0 %v1256
    %1719 = vmatpush1.bf16.msra.mxu0 %v1255
    %1720 = vmatprep.subr.bf16.mxu0 %v1260
    %1721 = vmatpush1.bf16.msra.mxu0 %v1259
    %1722 = vmatprep.subr.bf16.mxu0 %v1264
    %1723 = vmatpush1.bf16.msra.mxu0 %v1263
    %1724 = vmatprep.mubr.bf16.mxu0 %v358
    %1725 = vmatmul.mubr.bf16.gmra.mrb[0].mxu0 %v357
    %v1726 = vpop.f32.mrb[0].mxu0
    %v1727 = vadd.f32 %v1686, %v1726
    %v1728 = vpop.f32.mrb[0].mxu0
    %v1729 = vadd.f32 %v1688, %v1728
    %v1730 = vpop.f32.mrb[0].mxu0
    %v1731 = vpop.f32.mrb[0].mxu0
    %1732 = vdwg.mxu0
    %1733 = vmatprep.subr.bf16.mxu0 %v1268
    %1734 = vmatpush1.bf16.msra.mxu0 %v1267
    %1735 = vmatprep.subr.bf16.mxu0 %v1272
    %1736 = vmatpush1.bf16.msra.mxu0 %v1271
    %1737 = vmatprep.subr.bf16.mxu0 %v1276
    %1738 = vmatpush1.bf16.msra.mxu0 %v1275
    %1739 = vmatprep.subr.bf16.mxu0 %v1280
    %1740 = vmatpush1.bf16.msra.mxu0 %v1279
    %1741 = vmatprep.subr.bf16.mxu0 %v1284
    %1742 = vmatpush1.bf16.msra.mxu0 %v1283
    %1743 = vmatprep.subr.bf16.mxu0 %v1288
    %1744 = vmatpush1.bf16.msra.mxu0 %v1287
    %1745 = vmatprep.subr.bf16.mxu0 %v1292
    %1746 = vmatpush1.bf16.msra.mxu0 %v1291
    %1747 = vmatprep.subr.bf16.mxu0 %v1296
    %1748 = vmatpush1.bf16.msra.mxu0 %v1295
    %1749 = vmatprep.subr.bf16.mxu0 %v1300
    %1750 = vmatpush1.bf16.msra.mxu0 %v1299
    %1751 = vmatprep.subr.bf16.mxu0 %v1304
    %1752 = vmatpush1.bf16.msra.mxu0 %v1303
    %1753 = vmatprep.subr.bf16.mxu0 %v1308
    %1754 = vmatpush1.bf16.msra.mxu0 %v1307
    %1755 = vmatprep.subr.bf16.mxu0 %v1312
    %1756 = vmatpush1.bf16.msra.mxu0 %v1311
    %1757 = vmatprep.subr.bf16.mxu0 %v1316
    %1758 = vmatpush1.bf16.msra.mxu0 %v1315
    %1759 = vmatprep.subr.bf16.mxu0 %v1320
    %1760 = vmatpush1.bf16.msra.mxu0 %v1319
    %1761 = vmatprep.subr.bf16.mxu0 %v1324
    %1762 = vmatpush1.bf16.msra.mxu0 %v1323
    %1763 = vmatprep.subr.bf16.mxu0 %v1328
    %1764 = vmatpush1.bf16.msra.mxu0 %v1327
    %1765 = vmatprep.mubr.bf16.mxu0 %v360
    %1766 = vmatmul.mubr.bf16.gmra.mrb[0].mxu0 %v359
    %v1767 = vpop.f32.mrb[0].mxu0
    %v1768 = vadd.f32 %v1727, %v1767
    %v1769 = vpop.f32.mrb[0].mxu0
    %v1770 = vadd.f32 %v1729, %v1769
    %v1771 = vpop.f32.mrb[0].mxu0
    %v1772 = vpop.f32.mrb[0].mxu0
    %1773 = vdwg.mxu0
    %1774 = vmatprep.subr.bf16.mxu0 %v1332
    %1775 = vmatpush1.bf16.msra.mxu0 %v1331
    %1776 = vmatprep.subr.bf16.mxu0 %v1336
    %1777 = vmatpush1.bf16.msra.mxu0 %v1335
    %1778 = vmatprep.subr.bf16.mxu0 %v1340
    %1779 = vmatpush1.bf16.msra.mxu0 %v1339
    %1780 = vmatprep.subr.bf16.mxu0 %v1344
    %1781 = vmatpush1.bf16.msra.mxu0 %v1343
    %1782 = vmatprep.subr.bf16.mxu0 %v1348
    %1783 = vmatpush1.bf16.msra.mxu0 %v1347
    %1784 = vmatprep.subr.bf16.mxu0 %v1352
    %1785 = vmatpush1.bf16.msra.mxu0 %v1351
    %1786 = vmatprep.subr.bf16.mxu0 %v1356
    %1787 = vmatpush1.bf16.msra.mxu0 %v1355
    %1788 = vmatprep.subr.bf16.mxu0 %v1360
    %1789 = vmatpush1.bf16.msra.mxu0 %v1359
    %1790 = vmatprep.subr.bf16.mxu0 %v1364
    %1791 = vmatpush1.bf16.msra.mxu0 %v1363
    %1792 = vmatprep.subr.bf16.mxu0 %v1368
    %1793 = vmatpush1.bf16.msra.mxu0 %v1367
    %1794 = vmatprep.subr.bf16.mxu0 %v1372
    %1795 = vmatpush1.bf16.msra.mxu0 %v1371
    %1796 = vmatprep.subr.bf16.mxu0 %v1376
    %1797 = vmatpush1.bf16.msra.mxu0 %v1375
    %1798 = vmatprep.subr.bf16.mxu0 %v1380
    %1799 = vmatpush1.bf16.msra.mxu0 %v1379
    %1800 = vmatprep.subr.bf16.mxu0 %v1384
    %1801 = vmatpush1.bf16.msra.mxu0 %v1383
    %1802 = vmatprep.subr.bf16.mxu0 %v1388
    %1803 = vmatpush1.bf16.msra.mxu0 %v1387
    %1804 = vmatprep.subr.bf16.mxu0 %v1392
    %1805 = vmatpush1.bf16.msra.mxu0 %v1391
    %1806 = vmatprep.mubr.bf16.mxu0 %v362
    %1807 = vmatmul.mubr.bf16.gmra.mrb[0].mxu0 %v361
    %v1808 = vpop.f32.mrb[0].mxu0
    %v1809 = vadd.f32 %v1768, %v1808
    %v1810 = vpop.f32.mrb[0].mxu0
    %v1811 = vadd.f32 %v1770, %v1810
    %v1812 = vpop.f32.mrb[0].mxu0
    %v1813 = vpop.f32.mrb[0].mxu0
    %1814 = vdwg.mxu0
    %1815 = vmatprep.subr.bf16.mxu0 %v1142
    %1816 = vmatpush1.bf16.msra.mxu0 %v1141
    %1817 = vmatprep.subr.bf16.mxu0 %v1146
    %1818 = vmatpush1.bf16.msra.mxu0 %v1145
    %1819 = vmatprep.subr.bf16.mxu0 %v1150
    %1820 = vmatpush1.bf16.msra.mxu0 %v1149
    %1821 = vmatprep.subr.bf16.mxu0 %v1154
    %1822 = vmatpush1.bf16.msra.mxu0 %v1153
    %1823 = vmatprep.subr.bf16.mxu0 %v1158
    %1824 = vmatpush1.bf16.msra.mxu0 %v1157
    %1825 = vmatprep.subr.bf16.mxu0 %v1162
    %1826 = vmatpush1.bf16.msra.mxu0 %v1161
    %1827 = vmatprep.subr.bf16.mxu0 %v1166
    %1828 = vmatpush1.bf16.msra.mxu0 %v1165
    %1829 = vmatprep.subr.bf16.mxu0 %v1170
    %1830 = vmatpush1.bf16.msra.mxu0 %v1169
    %1831 = vmatprep.subr.bf16.mxu0 %v1174
    %1832 = vmatpush1.bf16.msra.mxu0 %v1173
    %1833 = vmatprep.subr.bf16.mxu0 %v1178
    %1834 = vmatpush1.bf16.msra.mxu0 %v1177
    %1835 = vmatprep.subr.bf16.mxu0 %v1182
    %1836 = vmatpush1.bf16.msra.mxu0 %v1181
    %1837 = vmatprep.subr.bf16.mxu0 %v1186
    %1838 = vmatpush1.bf16.msra.mxu0 %v1185
    %1839 = vmatprep.subr.bf16.mxu0 %v1190
    %1840 = vmatpush1.bf16.msra.mxu0 %v1189
    %1841 = vmatprep.subr.bf16.mxu0 %v1194
    %1842 = vmatpush1.bf16.msra.mxu0 %v1193
    %1843 = vmatprep.subr.bf16.mxu0 %v1198
    %1844 = vmatpush1.bf16.msra.mxu0 %v1197
    %1845 = vmatprep.subr.bf16.mxu0 %v1202
    %1846 = vmatpush1.bf16.msra.mxu0 %v1201
    %1847 = vmatprep.mubr.bf16.mxu0 %v356
    %1848 = vmatmul.mubr.bf16.gmra.mrb[0].mxu0 %v355
    %v1849 = vpop.f32.mrb[0].mxu0
    %v1850 = vadd.f32 %v334, %v1849
    %v1851 = vpop.f32.mrb[0].mxu0
    %v1852 = vadd.f32 %v338, %v1851
    %v1853 = vpop.f32.mrb[0].mxu0
    %v1854 = vpop.f32.mrb[0].mxu0
    %1855 = vdwg.mxu0
    %1856 = vmatprep.subr.bf16.mxu0 %v1206
    %1857 = vmatpush1.bf16.msra.mxu0 %v1205
    %1858 = vmatprep.subr.bf16.mxu0 %v1210
    %1859 = vmatpush1.bf16.msra.mxu0 %v1209
    %1860 = vmatprep.subr.bf16.mxu0 %v1214
    %1861 = vmatpush1.bf16.msra.mxu0 %v1213
    %1862 = vmatprep.subr.bf16.mxu0 %v1218
    %1863 = vmatpush1.bf16.msra.mxu0 %v1217
    %1864 = vmatprep.subr.bf16.mxu0 %v1222
    %1865 = vmatpush1.bf16.msra.mxu0 %v1221
    %1866 = vmatprep.subr.bf16.mxu0 %v1226
    %1867 = vmatpush1.bf16.msra.mxu0 %v1225
    %1868 = vmatprep.subr.bf16.mxu0 %v1230
    %1869 = vmatpush1.bf16.msra.mxu0 %v1229
    %1870 = vmatprep.subr.bf16.mxu0 %v1234
    %1871 = vmatpush1.bf16.msra.mxu0 %v1233
    %1872 = vmatprep.subr.bf16.mxu0 %v1238
    %1873 = vmatpush1.bf16.msra.mxu0 %v1237
    %1874 = vmatprep.subr.bf16.mxu0 %v1242
    %1875 = vmatpush1.bf16.msra.mxu0 %v1241
    %1876 = vmatprep.subr.bf16.mxu0 %v1246
    %1877 = vmatpush1.bf16.msra.mxu0 %v1245
    %1878 = vmatprep.subr.bf16.mxu0 %v1250
    %1879 = vmatpush1.bf16.msra.mxu0 %v1249
    %1880 = vmatprep.subr.bf16.mxu0 %v1254
    %1881 = vmatpush1.bf16.msra.mxu0 %v1253
    %1882 = vmatprep.subr.bf16.mxu0 %v1258
    %1883 = vmatpush1.bf16.msra.mxu0 %v1257
    %1884 = vmatprep.subr.bf16.mxu0 %v1262
    %1885 = vmatpush1.bf16.msra.mxu0 %v1261
    %1886 = vmatprep.subr.bf16.mxu0 %v1266
    %1887 = vmatpush1.bf16.msra.mxu0 %v1265
    %1888 = vmatprep.mubr.bf16.mxu0 %v358
    %1889 = vmatmul.mubr.bf16.gmra.mrb[0].mxu0 %v357
    %v1890 = vpop.f32.mrb[0].mxu0
    %v1891 = vadd.f32 %v1850, %v1890
    %v1892 = vpop.f32.mrb[0].mxu0
    %v1893 = vadd.f32 %v1852, %v1892
    %v1894 = vpop.f32.mrb[0].mxu0
    %v1895 = vpop.f32.mrb[0].mxu0
    %1896 = vdwg.mxu0
    %1897 = vmatprep.subr.bf16.mxu0 %v1270
    %1898 = vmatpush1.bf16.msra.mxu0 %v1269
    %1899 = vmatprep.subr.bf16.mxu0 %v1274
    %1900 = vmatpush1.bf16.msra.mxu0 %v1273
    %1901 = vmatprep.subr.bf16.mxu0 %v1278
    %1902 = vmatpush1.bf16.msra.mxu0 %v1277
    %1903 = vmatprep.subr.bf16.mxu0 %v1282
    %1904 = vmatpush1.bf16.msra.mxu0 %v1281
    %1905 = vmatprep.subr.bf16.mxu0 %v1286
    %1906 = vmatpush1.bf16.msra.mxu0 %v1285
    %1907 = vmatprep.subr.bf16.mxu0 %v1290
    %1908 = vmatpush1.bf16.msra.mxu0 %v1289
    %1909 = vmatprep.subr.bf16.mxu0 %v1294
    %1910 = vmatpush1.bf16.msra.mxu0 %v1293
    %1911 = vmatprep.subr.bf16.mxu0 %v1298
    %1912 = vmatpush1.bf16.msra.mxu0 %v1297
    %1913 = vmatprep.subr.bf16.mxu0 %v1302
    %1914 = vmatpush1.bf16.msra.mxu0 %v1301
    %1915 = vmatprep.subr.bf16.mxu0 %v1306
    %1916 = vmatpush1.bf16.msra.mxu0 %v1305
    %1917 = vmatprep.subr.bf16.mxu0 %v1310
    %1918 = vmatpush1.bf16.msra.mxu0 %v1309
    %1919 = vmatprep.subr.bf16.mxu0 %v1314
    %1920 = vmatpush1.bf16.msra.mxu0 %v1313
    %1921 = vmatprep.subr.bf16.mxu0 %v1318
    %1922 = vmatpush1.bf16.msra.mxu0 %v1317
    %1923 = vmatprep.subr.bf16.mxu0 %v1322
    %1924 = vmatpush1.bf16.msra.mxu0 %v1321
    %1925 = vmatprep.subr.bf16.mxu0 %v1326
    %1926 = vmatpush1.bf16.msra.mxu0 %v1325
    %1927 = vmatprep.subr.bf16.mxu0 %v1330
    %1928 = vmatpush1.bf16.msra.mxu0 %v1329
    %1929 = vmatprep.mubr.bf16.mxu0 %v360
    %1930 = vmatmul.mubr.bf16.gmra.mrb[0].mxu0 %v359
    %v1931 = vpop.f32.mrb[0].mxu0
    %v1932 = vadd.f32 %v1891, %v1931
    %v1933 = vpop.f32.mrb[0].mxu0
    %v1934 = vadd.f32 %v1893, %v1933
    %v1935 = vpop.f32.mrb[0].mxu0
    %v1936 = vpop.f32.mrb[0].mxu0
    %1937 = vdwg.mxu0
    %1938 = vmatprep.subr.bf16.mxu0 %v1334
    %1939 = vmatpush1.bf16.msra.mxu0 %v1333
    %1940 = vmatprep.subr.bf16.mxu0 %v1338
    %1941 = vmatpush1.bf16.msra.mxu0 %v1337
    %1942 = vmatprep.subr.bf16.mxu0 %v1342
    %1943 = vmatpush1.bf16.msra.mxu0 %v1341
    %1944 = vmatprep.subr.bf16.mxu0 %v1346
    %1945 = vmatpush1.bf16.msra.mxu0 %v1345
    %1946 = vmatprep.subr.bf16.mxu0 %v1350
    %1947 = vmatpush1.bf16.msra.mxu0 %v1349
    %1948 = vmatprep.subr.bf16.mxu0 %v1354
    %1949 = vmatpush1.bf16.msra.mxu0 %v1353
    %1950 = vmatprep.subr.bf16.mxu0 %v1358
    %1951 = vmatpush1.bf16.msra.mxu0 %v1357
    %1952 = vmatprep.subr.bf16.mxu0 %v1362
    %1953 = vmatpush1.bf16.msra.mxu0 %v1361
    %1954 = vmatprep.subr.bf16.mxu0 %v1366
    %1955 = vmatpush1.bf16.msra.mxu0 %v1365
    %1956 = vmatprep.subr.bf16.mxu0 %v1370
    %1957 = vmatpush1.bf16.msra.mxu0 %v1369
    %1958 = vmatprep.subr.bf16.mxu0 %v1374
    %1959 = vmatpush1.bf16.msra.mxu0 %v1373
    %1960 = vmatprep.subr.bf16.mxu0 %v1378
    %1961 = vmatpush1.bf16.msra.mxu0 %v1377
    %1962 = vmatprep.subr.bf16.mxu0 %v1382
    %1963 = vmatpush1.bf16.msra.mxu0 %v1381
    %1964 = vmatprep.subr.bf16.mxu0 %v1386
    %1965 = vmatpush1.bf16.msra.mxu0 %v1385
    %1966 = vmatprep.subr.bf16.mxu0 %v1390
    %1967 = vmatpush1.bf16.msra.mxu0 %v1389
    %1968 = vmatprep.subr.bf16.mxu0 %v1394
    %1969 = vmatpush1.bf16.msra.mxu0 %v1393
    %1970 = vmatprep.mubr.bf16.mxu0 %v362
    %1971 = vmatmul.mubr.bf16.gmra.mrb[0].mxu0 %v361
    %v1972 = vpop.f32.mrb[0].mxu0
    %v1973 = vadd.f32 %v1932, %v1972
    %v1974 = vpop.f32.mrb[0].mxu0
    %v1975 = vadd.f32 %v1934, %v1974
    %v1976 = vpop.f32.mrb[0].mxu0
    %v1977 = vpop.f32.mrb[0].mxu0
    %1978 = vdwg.mxu0
    %v1979 = vmax.f32 %v1809, 0.0
    %v1980 = vmax.f32 %v1811, 0.0
    %v1981 = vmax.f32 %v1973, 0.0
    %v1982 = vmax.f32 %v1975, 0.0
    %v1983 = vpack.c.bf16 %v1979, %v1979
    %v1984 = vpack.c.bf16 %v1980, %v1980
    %v1985 = vpack.c.bf16 %v1981, %v1981
    %v1986 = vpack.c.bf16 %v1982, %v1982
    %v1987 = vld [vmem:[#allocation7] sm:$0xf]
    %v1988 = vld [vmem:[#allocation7 + $0x4] sm:$0xf]
    %v1989 = vld [vmem:[#allocation7 + $0x8] sm:$0xf]
    %v1990 = vld [vmem:[#allocation7 + $0xc] sm:$0xf]
    %v1991 = vld [vmem:[#allocation7 + $0x10] sm:$0xf]
    %v1992 = vld [vmem:[#allocation7 + $0x14] sm:$0xf]
    %v1993 = vld [vmem:[#allocation7 + $0x18] sm:$0xf]
    %v1994 = vld [vmem:[#allocation7 + $0x1c] sm:$0xf]
    %v1995 = vld [vmem:[#allocation7 + $0x20] sm:$0xf]
    %v1996 = vld [vmem:[#allocation7 + $0x24] sm:$0xf]
    %v1997 = vld [vmem:[#allocation7 + $0x28] sm:$0xf]
    %v1998 = vld [vmem:[#allocation7 + $0x2c] sm:$0xf]
    %v1999 = vld [vmem:[#allocation7 + $0x30] sm:$0xf]
    %v2000 = vld [vmem:[#allocation7 + $0x34] sm:$0xf]
    %v2001 = vld [vmem:[#allocation7 + $0x38] sm:$0xf]
    %v2002 = vld [vmem:[#allocation7 + $0x3c] sm:$0xf]
    %v2003 = vld [vmem:[#allocation7 + $0x40] sm:$0xf]
    %v2004 = vld [vmem:[#allocation7 + $0x44] sm:$0xf]
    %v2005 = vld [vmem:[#allocation7 + $0x48] sm:$0xf]
    %v2006 = vld [vmem:[#allocation7 + $0x4c] sm:$0xf]
    %v2007 = vld [vmem:[#allocation7 + $0x50] sm:$0xf]
    %v2008 = vld [vmem:[#allocation7 + $0x54] sm:$0xf]
    %v2009 = vld [vmem:[#allocation7 + $0x58] sm:$0xf]
    %v2010 = vld [vmem:[#allocation7 + $0x5c] sm:$0xf]
    %v2011 = vld [vmem:[#allocation7 + $0x60] sm:$0xf]
    %v2012 = vld [vmem:[#allocation7 + $0x64] sm:$0xf]
    %v2013 = vld [vmem:[#allocation7 + $0x68] sm:$0xf]
    %v2014 = vld [vmem:[#allocation7 + $0x6c] sm:$0xf]
    %v2015 = vld [vmem:[#allocation7 + $0x70] sm:$0xf]
    %v2016 = vld [vmem:[#allocation7 + $0x74] sm:$0xf]
    %v2017 = vld [vmem:[#allocation7 + $0x78] sm:$0xf]
    %v2018 = vld [vmem:[#allocation7 + $0x7c] sm:$0xf]
    %v2019 = vld [vmem:[#allocation7 + $0x80] sm:$0xf]
    %v2020 = vld [vmem:[#allocation7 + $0x84] sm:$0xf]
    %v2021 = vld [vmem:[#allocation7 + $0x88] sm:$0xf]
    %v2022 = vld [vmem:[#allocation7 + $0x8c] sm:$0xf]
    %v2023 = vld [vmem:[#allocation7 + $0x90] sm:$0xf]
    %v2024 = vld [vmem:[#allocation7 + $0x94] sm:$0xf]
    %v2025 = vld [vmem:[#allocation7 + $0x98] sm:$0xf]
    %v2026 = vld [vmem:[#allocation7 + $0x9c] sm:$0xf]
    %v2027 = vld [vmem:[#allocation7 + $0xa0] sm:$0xf]
    %v2028 = vld [vmem:[#allocation7 + $0xa4] sm:$0xf]
    %v2029 = vld [vmem:[#allocation7 + $0xa8] sm:$0xf]
    %v2030 = vld [vmem:[#allocation7 + $0xac] sm:$0xf]
    %v2031 = vld [vmem:[#allocation7 + $0xb0] sm:$0xf]
    %v2032 = vld [vmem:[#allocation7 + $0xb4] sm:$0xf]
    %v2033 = vld [vmem:[#allocation7 + $0xb8] sm:$0xf]
    %v2034 = vld [vmem:[#allocation7 + $0xbc] sm:$0xf]
    %v2035 = vld [vmem:[#allocation7 + $0xc0] sm:$0xf]
    %v2036 = vld [vmem:[#allocation7 + $0xc4] sm:$0xf]
    %v2037 = vld [vmem:[#allocation7 + $0xc8] sm:$0xf]
    %v2038 = vld [vmem:[#allocation7 + $0xcc] sm:$0xf]
    %v2039 = vld [vmem:[#allocation7 + $0xd0] sm:$0xf]
    %v2040 = vld [vmem:[#allocation7 + $0xd4] sm:$0xf]
    %v2041 = vld [vmem:[#allocation7 + $0xd8] sm:$0xf]
    %v2042 = vld [vmem:[#allocation7 + $0xdc] sm:$0xf]
    %v2043 = vld [vmem:[#allocation7 + $0xe0] sm:$0xf]
    %v2044 = vld [vmem:[#allocation7 + $0xe4] sm:$0xf]
    %v2045 = vld [vmem:[#allocation7 + $0xe8] sm:$0xf]
    %v2046 = vld [vmem:[#allocation7 + $0xec] sm:$0xf]
    %v2047 = vld [vmem:[#allocation7 + $0xf0] sm:$0xf]
    %v2048 = vld [vmem:[#allocation7 + $0xf4] sm:$0xf]
    %v2049 = vld [vmem:[#allocation7 + $0xf8] sm:$0xf]
    %v2050 = vld [vmem:[#allocation7 + $0xfc] sm:$0xf]
    %v2051 = vld [vmem:[%s4] sm:$0x1]
    %v2053 = vlaneseq
    %v2054 = vshrl.u32 %v2053, 7
    %v2055 = vsub.s32 0, %v2054
    %v2056 = vrot.slane %v2051, %v2055
    %v2122 = vunpack.c.l.b16 %v1987
    %v2123 = vunpack.c.l.b16 %v1988
    %v2124 = vunpack.c.l.b16 %v1989
    %v2125 = vunpack.c.l.b16 %v1990
    %v2126 = vunpack.c.l.b16 %v1991
    %v2127 = vunpack.c.l.b16 %v1992
    %v2128 = vunpack.c.l.b16 %v1993
    %v2129 = vunpack.c.l.b16 %v1994
    %v2130 = vunpack.c.l.b16 %v1995
    %v2131 = vunpack.c.l.b16 %v1996
    %v2132 = vunpack.c.l.b16 %v1997
    %v2133 = vunpack.c.l.b16 %v1998
    %v2134 = vunpack.c.l.b16 %v1999
    %v2135 = vunpack.c.l.b16 %v2000
    %v2136 = vunpack.c.l.b16 %v2001
    %v2137 = vunpack.c.l.b16 %v2002
    %v2138 = vunpack.c.l.b16 %v2003
    %v2139 = vunpack.c.l.b16 %v2004
    %v2140 = vunpack.c.l.b16 %v2005
    %v2141 = vunpack.c.l.b16 %v2006
    %v2142 = vunpack.c.l.b16 %v2007
    %v2143 = vunpack.c.l.b16 %v2008
    %v2144 = vunpack.c.l.b16 %v2009
    %v2145 = vunpack.c.l.b16 %v2010
    %v2146 = vunpack.c.l.b16 %v2011
    %v2147 = vunpack.c.l.b16 %v2012
    %v2148 = vunpack.c.l.b16 %v2013
    %v2149 = vunpack.c.l.b16 %v2014
    %v2150 = vunpack.c.l.b16 %v2015
    %v2151 = vunpack.c.l.b16 %v2016
    %v2152 = vunpack.c.l.b16 %v2017
    %v2153 = vunpack.c.l.b16 %v2018
    %v2154 = vunpack.c.l.b16 %v2019
    %v2155 = vunpack.c.l.b16 %v2020
    %v2156 = vunpack.c.l.b16 %v2021
    %v2157 = vunpack.c.l.b16 %v2022
    %v2158 = vunpack.c.l.b16 %v2023
    %v2159 = vunpack.c.l.b16 %v2024
    %v2160 = vunpack.c.l.b16 %v2025
    %v2161 = vunpack.c.l.b16 %v2026
    %v2162 = vunpack.c.l.b16 %v2027
    %v2163 = vunpack.c.l.b16 %v2028
    %v2164 = vunpack.c.l.b16 %v2029
    %v2165 = vunpack.c.l.b16 %v2030
    %v2166 = vunpack.c.l.b16 %v2031
    %v2167 = vunpack.c.l.b16 %v2032
    %v2168 = vunpack.c.l.b16 %v2033
    %v2169 = vunpack.c.l.b16 %v2034
    %v2170 = vunpack.c.l.b16 %v2035
    %v2171 = vunpack.c.l.b16 %v2036
    %v2172 = vunpack.c.l.b16 %v2037
    %v2173 = vunpack.c.l.b16 %v2038
    %v2174 = vunpack.c.l.b16 %v2039
    %v2175 = vunpack.c.l.b16 %v2040
    %v2176 = vunpack.c.l.b16 %v2041
    %v2177 = vunpack.c.l.b16 %v2042
    %v2178 = vunpack.c.l.b16 %v2043
    %v2179 = vunpack.c.l.b16 %v2044
    %v2180 = vunpack.c.l.b16 %v2045
    %v2181 = vunpack.c.l.b16 %v2046
    %v2182 = vunpack.c.l.b16 %v2047
    %v2183 = vunpack.c.l.b16 %v2048
    %v2184 = vunpack.c.l.b16 %v2049
    %v2185 = vunpack.c.l.b16 %v2050
    %v2186 = vpack.c.b16 %v2123, %v2122
    %v2187 = vpack.c.b16 %v2125, %v2124
    %v2188 = vpack.c.b16 %v2127, %v2126
    %v2189 = vpack.c.b16 %v2129, %v2128
    %v2190 = vpack.c.b16 %v2131, %v2130
    %v2191 = vpack.c.b16 %v2133, %v2132
    %v2192 = vpack.c.b16 %v2135, %v2134
    %v2193 = vpack.c.b16 %v2137, %v2136
    %v2194 = vpack.c.b16 %v2139, %v2138
    %v2195 = vpack.c.b16 %v2141, %v2140
    %v2196 = vpack.c.b16 %v2143, %v2142
    %v2197 = vpack.c.b16 %v2145, %v2144
    %v2198 = vpack.c.b16 %v2147, %v2146
    %v2199 = vpack.c.b16 %v2149, %v2148
    %v2200 = vpack.c.b16 %v2151, %v2150
    %v2201 = vpack.c.b16 %v2153, %v2152
    %v2202 = vpack.c.b16 %v2155, %v2154
    %v2203 = vpack.c.b16 %v2157, %v2156
    %v2204 = vpack.c.b16 %v2159, %v2158
    %v2205 = vpack.c.b16 %v2161, %v2160
    %v2206 = vpack.c.b16 %v2163, %v2162
    %v2207 = vpack.c.b16 %v2165, %v2164
    %v2208 = vpack.c.b16 %v2167, %v2166
    %v2209 = vpack.c.b16 %v2169, %v2168
    %v2210 = vpack.c.b16 %v2171, %v2170
    %v2211 = vpack.c.b16 %v2173, %v2172
    %v2212 = vpack.c.b16 %v2175, %v2174
    %v2213 = vpack.c.b16 %v2177, %v2176
    %v2214 = vpack.c.b16 %v2179, %v2178
    %v2215 = vpack.c.b16 %v2181, %v2180
    %v2216 = vpack.c.b16 %v2183, %v2182
    %v2217 = vpack.c.b16 %v2185, %v2184
    %2250 = vmatprep.subr.bf16.mxu0 0
    %2251 = vmatpush1.bf16.msra.mxu0 %v2186
    %2252 = vmatprep.subr.bf16.mxu0 0
    %2253 = vmatpush1.bf16.msra.mxu0 %v2187
    %2254 = vmatprep.subr.bf16.mxu0 0
    %2255 = vmatpush1.bf16.msra.mxu0 %v2188
    %2256 = vmatprep.subr.bf16.mxu0 0
    %2257 = vmatpush1.bf16.msra.mxu0 %v2189
    %2258 = vmatprep.subr.bf16.mxu0 0
    %2259 = vmatpush1.bf16.msra.mxu0 %v2190
    %2260 = vmatprep.subr.bf16.mxu0 0
    %2261 = vmatpush1.bf16.msra.mxu0 %v2191
    %2262 = vmatprep.subr.bf16.mxu0 0
    %2263 = vmatpush1.bf16.msra.mxu0 %v2192
    %2264 = vmatprep.subr.bf16.mxu0 0
    %2265 = vmatpush1.bf16.msra.mxu0 %v2193
    %2266 = vmatprep.subr.bf16.mxu0 0
    %2267 = vmatpush1.bf16.msra.mxu0 %v2194
    %2268 = vmatprep.subr.bf16.mxu0 0
    %2269 = vmatpush1.bf16.msra.mxu0 %v2195
    %2270 = vmatprep.subr.bf16.mxu0 0
    %2271 = vmatpush1.bf16.msra.mxu0 %v2196
    %2272 = vmatprep.subr.bf16.mxu0 0
    %2273 = vmatpush1.bf16.msra.mxu0 %v2197
    %2274 = vmatprep.subr.bf16.mxu0 0
    %2275 = vmatpush1.bf16.msra.mxu0 %v2198
    %2276 = vmatprep.subr.bf16.mxu0 0
    %2277 = vmatpush1.bf16.msra.mxu0 %v2199
    %2278 = vmatprep.subr.bf16.mxu0 0
    %2279 = vmatpush1.bf16.msra.mxu0 %v2200
    %2280 = vmatprep.subr.bf16.mxu0 0
    %2281 = vmatpush1.bf16.msra.mxu0 %v2201
    %2282 = vmatprep.mubr.bf16.mxu0 %v1984
    %2283 = vmatmul.mubr.bf16.gmra.mrb[0].mxu0 %v1983
    %v2284 = vpop.f32.mrb[0].mxu0
    %v2285 = vadd.f32 %v2056, %v2284
    %v2286 = vpop.f32.mrb[0].mxu0
    %v2287 = vpop.f32.mrb[0].mxu0
    %v2288 = vpop.f32.mrb[0].mxu0
    %2289 = vdwg.mxu0
    %2290 = vmatprep.subr.bf16.mxu0 0
    %2291 = vmatpush1.bf16.msra.mxu0 %v2202
    %2292 = vmatprep.subr.bf16.mxu0 0
    %2293 = vmatpush1.bf16.msra.mxu0 %v2203
    %2294 = vmatprep.subr.bf16.mxu0 0
    %2295 = vmatpush1.bf16.msra.mxu0 %v2204
    %2296 = vmatprep.subr.bf16.mxu0 0
    %2297 = vmatpush1.bf16.msra.mxu0 %v2205
    %2298 = vmatprep.subr.bf16.mxu0 0
    %2299 = vmatpush1.bf16.msra.mxu0 %v2206
    %2300 = vmatprep.subr.bf16.mxu0 0
    %2301 = vmatpush1.bf16.msra.mxu0 %v2207
    %2302 = vmatprep.subr.bf16.mxu0 0
    %2303 = vmatpush1.bf16.msra.mxu0 %v2208
    %2304 = vmatprep.subr.bf16.mxu0 0
    %2305 = vmatpush1.bf16.msra.mxu0 %v2209
    %2306 = vmatprep.subr.bf16.mxu0 0
    %2307 = vmatpush1.bf16.msra.mxu0 %v2210
    %2308 = vmatprep.subr.bf16.mxu0 0
    %2309 = vmatpush1.bf16.msra.mxu0 %v2211
    %2310 = vmatprep.subr.bf16.mxu0 0
    %2311 = vmatpush1.bf16.msra.mxu0 %v2212
    %2312 = vmatprep.subr.bf16.mxu0 0
    %2313 = vmatpush1.bf16.msra.mxu0 %v2213
    %2314 = vmatprep.subr.bf16.mxu0 0
    %2315 = vmatpush1.bf16.msra.mxu0 %v2214
    %2316 = vmatprep.subr.bf16.mxu0 0
    %2317 = vmatpush1.bf16.msra.mxu0 %v2215
    %2318 = vmatprep.subr.bf16.mxu0 0
    %2319 = vmatpush1.bf16.msra.mxu0 %v2216
    %2320 = vmatprep.subr.bf16.mxu0 0
    %2321 = vmatpush1.bf16.msra.mxu0 %v2217
    %2322 = vmatprep.mubr.bf16.mxu0 %v1986
    %2323 = vmatmul.mubr.bf16.gmra.mrb[0].mxu0 %v1985
    %v2324 = vpop.f32.mrb[0].mxu0
    %v2325 = vadd.f32 %v2285, %v2324
    %v2326 = vpop.f32.mrb[0].mxu0
    %v2327 = vpop.f32.mrb[0].mxu0
    %v2328 = vpop.f32.mrb[0].mxu0
    %2329 = vdwg.mxu0
    %v2330 = vmax.f32 %v2325, 0.0
    %2331 = vst [vmem:[#allocation8] sm:$0xff] %v2330
    // Predicated region
    $region34: #{tpu_custom_call.1} parent=1 // pred_check
      _
    $region35: #{tpu_custom_call.1} parent=1 // pred_check_branch
      %2333 = sbr.rel (0) target = $region37
    $region36: #{tpu_custom_call.1} parent=1 // pred_region
      %s2335 = ssub.s32 128, 128
      %2336 = vsyncadd [#allocation4], %s2335
      %s2338 = sshll.u32 [#allocation8], 4
      %s2339 = int_to_ptr.vmem [resolvable:$true] %s2338
      %2341 = dma.vmem_to_hbm [thread:$0]  %s2339, 128, %s5, [#allocation4]
    $region37: #{tpu_custom_call.1} parent=1 // pred_fallthru
      _
    // Predicated region
    $region38: #{tpu_custom_call.1} parent=1 // pred_check
      _
    $region39: #{tpu_custom_call.1} parent=1 // pred_check_branch
      %2343 = sbr.rel (0) target = $region41
    $region40: #{tpu_custom_call.1} parent=1 // pred_region
      %2344 = dma.done [#allocation4], 128
    $region41: #{tpu_custom_call.1} parent=1 // pred_fallthru
      _
    %2345 = vsyncpa [#allocation3], 1
    %2346 = vsyncpa [#allocation6], 1
    %2347 = vsyncpa [#allocation4], 1

</llo_original>
